<compile_context>
chip_gen: v6e
topology: v6e:2x2x1
jax: 0.10.0
libtpu: 0.0.40
codegen_flags: <defaults>
</compile_context>

<pallas_src>
import functools

import jax
import jax.numpy as jnp
from jax.experimental import pallas as pl
from jax.experimental.pallas import tpu as pltpu

BN_EPS = 1e-5
ACT_DTYPE = jnp.bfloat16

_VMEM_LIMIT = None


def _compiler_params():
    """Per-chip scoped-VMEM cap: 3/4 of physical, clamped to 96 MiB.

    -> 96 MiB on v5e/v6e (128 MiB physical VMEM), 48 MiB on v7x (64 MiB)."""
    global _VMEM_LIMIT
    if _VMEM_LIMIT is None:
        try:
            cap = int(pltpu.get_tpu_info().vmem_capacity_bytes)
        except Exception:
            cap = 128 * 1024 * 1024
        _VMEM_LIMIT = int(min(96 * 1024 * 1024, (3 * cap) // 4))
    return pltpu.CompilerParams(
        dimension_semantics=("parallel",), vmem_limit_bytes=_VMEM_LIMIT
    )


# ---------------------------------------------------------------------------
# BlockSpec helpers
# ---------------------------------------------------------------------------
def _batched(shape):
    nd = len(shape)
    return pl.BlockSpec((1,) + tuple(shape[1:]),
                        lambda i, _nd=nd: (i,) + (0,) * (_nd - 1))


def _whole(shape):
    nd = len(shape)
    return pl.BlockSpec(tuple(shape), lambda i, _nd=nd: (0,) * _nd)


# ---------------------------------------------------------------------------
# In-kernel building blocks
# ---------------------------------------------------------------------------
def _subsample_hw(x, stride, ho, wo):
    """Subsample a (H, W, C) *value* to (ho, wo, C) with the given stride.

    Uses only reshape + static indexing (portable across Mosaic / interpret;
    avoids strided ref gathers entirely)."""
    if stride == 1:
        return x[:ho, :wo, :]
    c = x.shape[-1]
    x = x[:ho * stride, :wo * stride, :]
    x = x.reshape(ho, stride, wo * stride, c)[:, 0]
    return x.reshape(ho, wo, stride, c)[:, :, 0]


def _tap(src_ref, dy, dx, ho, wo, stride):
    """One im2col tap (dy, dx) at output stride from a zero-padded scratch."""
    region = src_ref[dy:dy + ho * stride, dx:dx + wo * stride, :]
    return _subsample_hw(region, stride, ho, wo)


def _im2col_dot(src_ref, w_ref, ksize, stride, ho, wo, cin):
    """im2col + MXU dot(s), f32 accumulation.

    cin <= 128  -> lane-concat the taps into one wide-K dot (K = k*k*cin) so
                   the systolic array depth is filled even for narrow layers.
    cin  > 128  -> per-tap accumulating dots (K = cin already >= MXU depth);
                   avoids materialising the (ho*wo, 9*cin) patch.
    """
    taps = [_tap(src_ref, dy, dx, ho, wo, stride)
            for dy in range(ksize) for dx in range(ksize)]
    cout = w_ref.shape[-1]
    if cin <= 128:
        patch = jnp.concatenate(taps, axis=-1).reshape(ho * wo, ksize * ksize * cin)
        return jnp.dot(patch, w_ref[...], preferred_element_type=jnp.float32)
    acc = jnp.zeros((ho * wo, cout), jnp.float32)
    for t, tap in enumerate(taps):
        acc = acc + jnp.dot(tap.reshape(ho * wo, cin),
                            w_ref[t * cin:(t + 1) * cin, :],
                            preferred_element_type=jnp.float32)
    return acc


def _conv_kernel(x_ref, w_ref, b_ref, o_ref, xpad_ref, *, relu):
    """Fused 3x3 stride-1 conv + folded-BN bias (+ ReLU); halo in VMEM scratch."""
    _, h, w, cin = x_ref.shape
    cout = o_ref.shape[-1]

    @pl.when(pl.program_id(0) == 0)
    def _init_halo():  # halo ring stays zero; interior rewritten every step
        xpad_ref[...] = jnp.zeros_like(xpad_ref)

    xpad_ref[1:1 + h, 1:1 + w, :] = x_ref[0]
    out = _im2col_dot(xpad_ref, w_ref, 3, 1, h, w, cin) + b_ref[...]
    if relu:
        out = jnp.maximum(out, 0.0)
    o_ref[...] = out.reshape(1, h, w, cout).astype(o_ref.dtype)


def _block_kernel(*refs, n_in, has_sc, stride):
    """Fully fused ResNet Block.

    Inputs (in order): x_i (n_in), w1_i (n_in), b1, w2, b2, [ws_i (n_in), bs].
    Output: o.  Scratch: xpad_i (n_in), hpad.
    The n_in input groups are the logical channel-concat of the PyTorch input
    (used by the up-blocks to avoid an XLA concatenate)."""
    idx = 0
    x_refs = refs[idx:idx + n_in]; idx += n_in
    w1_refs = refs[idx:idx + n_in]; idx += n_in
    b1_ref = refs[idx]; idx += 1
    w2_ref = refs[idx]; idx += 1
    b2_ref = refs[idx]; idx += 1
    if has_sc:
        ws_refs = refs[idx:idx + n_in]; idx += n_in
        bs_ref = refs[idx]; idx += 1
    o_ref = refs[idx]; idx += 1
    xpad_refs = refs[idx:idx + n_in]; idx += n_in
    hpad_ref = refs[idx]

    _, h, w, _ = x_refs[0].shape
    _, ho, wo, cout = o_ref.shape

    @pl.when(pl.program_id(0) == 0)
    def _init_halo():  # zero padded scratches once; interiors rewritten below
        for r in xpad_refs:
            r[...] = jnp.zeros_like(r)
        hpad_ref[...] = jnp.zeros_like(hpad_ref)

    # conv1 (3x3, stride) + bn1 + relu, accumulated over input channel groups.
    acc1 = None
    for i in range(n_in):
        cin = x_refs[i].shape[-1]
        xpad_refs[i][1:1 + h, 1:1 + w, :] = x_refs[i][0]
        part = _im2col_dot(xpad_refs[i], w1_refs[i], 3, stride, ho, wo, cin)
        acc1 = part if acc1 is None else acc1 + part
    h1 = jnp.maximum(acc1 + b1_ref[...], 0.0)

    # conv2 (3x3, stride 1) + bn2 — intermediate lives in a VMEM halo scratch.
    hpad_ref[1:1 + ho, 1:1 + wo, :] = h1.reshape(ho, wo, cout).astype(hpad_ref.dtype)
    acc2 = _im2col_dot(hpad_ref, w2_ref, 3, 1, ho, wo, cout) + b2_ref[...]

    # shortcut: strided 1x1 conv + bn, or identity.
    if has_sc:
        sc = None
        for i in range(n_in):
            cin = x_refs[i].shape[-1]
            xs = _subsample_hw(x_refs[i][0], stride, ho, wo)
            part = jnp.dot(xs.reshape(ho * wo, cin), ws_refs[i][...],
                           preferred_element_type=jnp.float32)
            sc = part if sc is None else sc + part
        sc = sc + bs_ref[...]
    else:
        sc = x_refs[0][0].reshape(ho * wo, cout).astype(jnp.float32)

    out = jnp.maximum(acc2 + sc, 0.0)
    o_ref[...] = out.reshape(1, ho, wo, cout).astype(o_ref.dtype)


def _gate_kernel(x_ref, em_ref, o_ref):
    """act = sum_c x*em ; out = x * sigmoid(act)  (class-conditioned gating).
    The channel reduction runs as an MXU matvec (not an XLU lane reduce)."""
    _, h, w, c = x_ref.shape
    x = x_ref[...].astype(jnp.float32).reshape(h * w, c)
    act = jnp.einsum("pc,qc->pq", x, em_ref[0].astype(jnp.float32),
                     preferred_element_type=jnp.float32)          # (h*w, 1)
    th = jax.nn.sigmoid(act)
    o_ref[...] = (x * th).reshape(1, h, w, c).astype(o_ref.dtype)


def _saliency_kernel(x_ref, w_ref, o_ref):
    """1x1 conv (C -> 2, no bias) + abs-ratio a/(a+b); lane-dense (1,1,H*W) out."""
    _, h, w, c = x_ref.shape
    x = x_ref[...].reshape(h * w, c)
    s = jnp.einsum("kc,pc->kp", w_ref[...], x,
                   preferred_element_type=jnp.float32)            # (2, H*W)
    a = jnp.abs(s[0:1, :])
    b = jnp.abs(s[1:2, :])
    # tiny eps guards a+b == 0 (PyTorch would emit NaN there)
    o_ref[...] = (a / (a + b + 1e-12)).reshape(1, 1, h * w).astype(o_ref.dtype)


# ---------------------------------------------------------------------------
# pallas_call wrappers (grid over batch; whole-image blocks at toy sizes)
# ---------------------------------------------------------------------------
def conv_bn_relu(x, w, b):
    n, h, wd, cin = x.shape
    cout = w.shape[-1]
    return pl.pallas_call(
        functools.partial(_conv_kernel, relu=True),
        out_shape=jax.ShapeDtypeStruct((n, h, wd, cout), ACT_DTYPE),
        grid=(n,),
        in_specs=[_batched(x.shape), _whole(w.shape), _whole(b.shape)],
        out_specs=_batched((n, h, wd, cout)),
        scratch_shapes=[pltpu.VMEM((h + 2, wd + 2, cin), ACT_DTYPE)],
        compiler_params=_compiler_params(),
    )(x, w, b)


def block_forward(pb, xs):
    """Fused residual Block over one or more channel-group inputs."""
    n, h, w, _ = xs[0].shape
    stride = pb["stride"]
    cout = pb["w2"].shape[-1]
    ho, wo = h // stride, w // stride
    has_sc = "ws" in pb
    n_in = len(xs)
    assert n_in == 1 or has_sc, "identity shortcut only valid for one input group"

    args, in_specs = [], []
    for x in xs:
        args.append(x); in_specs.append(_batched(x.shape))
    for wg in pb["w1"]:
        args.append(wg); in_specs.append(_whole(wg.shape))
    args.append(pb["b1"]); in_specs.append(_whole(pb["b1"].shape))
    args.append(pb["w2"]); in_specs.append(_whole(pb["w2"].shape))
    args.append(pb["b2"]); in_specs.append(_whole(pb["b2"].shape))
    if has_sc:
        for wg in pb["ws"]:
            args.append(wg); in_specs.append(_whole(wg.shape))
        args.append(pb["bs"]); in_specs.append(_whole(pb["bs"].shape))

    scratch = [pltpu.VMEM((h + 2, w + 2, int(x.shape[-1])), ACT_DTYPE) for x in xs]
    scratch.append(pltpu.VMEM((ho + 2, wo + 2, cout), ACT_DTYPE))

    return pl.pallas_call(
        functools.partial(_block_kernel, n_in=n_in, has_sc=has_sc, stride=stride),
        out_shape=jax.ShapeDtypeStruct((n, ho, wo, cout), ACT_DTYPE),
        grid=(n,),
        in_specs=in_specs,
        out_specs=_batched((n, ho, wo, cout)),
        scratch_shapes=scratch,
        compiler_params=_compiler_params(),
    )(*args)


def embedding_gate(x, em):
    n, h, w, c = x.shape
    em3 = em.reshape(n, 1, c).astype(jnp.float32)
    return pl.pallas_call(
        _gate_kernel,
        out_shape=jax.ShapeDtypeStruct((n, h, w, c), ACT_DTYPE),
        grid=(n,),
        in_specs=[_batched(x.shape),
                  pl.BlockSpec((1, 1, c), lambda i: (i, 0, 0))],
        out_specs=_batched((n, h, w, c)),
        compiler_params=_compiler_params(),
    )(x, em3)


def saliency_map(x, w):
    n, h, wd, c = x.shape
    out = pl.pallas_call(
        _saliency_kernel,
        out_shape=jax.ShapeDtypeStruct((n, 1, h * wd), jnp.float32),
        grid=(n,),
        in_specs=[_batched(x.shape), _whole(w.shape)],
        out_specs=pl.BlockSpec((1, 1, h * wd), lambda i: (i, 0, 0)),
        compiler_params=_compiler_params(),
    )(x, w)
    return out.reshape(n, 1, h, wd)


# ---------------------------------------------------------------------------
# Glue: pixel shuffle (small XLA transpose) and the up-sampling path
# ---------------------------------------------------------------------------
def pixel_shuffle_nhwc(x, r=2):
    """NHWC pixel shuffle with PyTorch channel ordering (c, ry, rx)."""
    n, h, w, c4 = x.shape
    c = c4 // (r * r)
    x = x.reshape(n, h, w, c, r, r)
    x = jnp.transpose(x, (0, 1, 4, 2, 5, 3))     # (N, H, ry, W, rx, C)
    return x.reshape(n, h * r, w * r, c)


def upblock_forward(p, x, passthrough):
    h = conv_bn_relu(x, p["up_w"], p["up_b"])    # (N, Hl, Wl, 4*Cout), already ReLU'd
    h = pixel_shuffle_nhwc(h, 2)                 # ReLU commutes with the shuffle
    # channel concat is fused into the follow-up block (two input groups)
    return block_forward(p["follow"], [h, passthrough])


# ---------------------------------------------------------------------------
# Parameter init (BN scale folded into the weights; inference-mode BN)
# ---------------------------------------------------------------------------
def _conv_weight(key, ksize, cin, cout):
    fan_in = ksize * ksize * cin
    return (jax.random.normal(key, (ksize, ksize, cin, cout), jnp.float32)
            / jnp.sqrt(float(fan_in)))


def _bn_params(key, cout):
    kg, kb = jax.random.split(key)
    gamma = 1.0 + 0.1 * jax.random.normal(kg, (cout,), jnp.float32)
    beta = 0.1 * jax.random.normal(kb, (cout,), jnp.float32)
    scale = gamma / jnp.sqrt(1.0 + BN_EPS)       # running_var=1, running_mean=0
    return scale, beta


def _fold_w(w, scale):
    kh, kw, cin, cout = w.shape
    return (w * scale).reshape(kh * kw * cin, cout).astype(ACT_DTYPE)


def _split_cin(w, cins):
    groups, off = [], 0
    for c in cins:
        groups.append(w[:, :, off:off + c, :])
        off += c
    return groups


def init_block(key, cins, planes, stride):
    cins = tuple(int(c) for c in cins)
    total = sum(cins)
    k1, k2, k3, kb1, kb2, kb3 = jax.random.split(key, 6)
    s1, b1 = _bn_params(kb1, planes)
    s2, b2 = _bn_params(kb2, planes)
    p = {
        "stride": int(stride),
        "w1": [_fold_w(g, s1)
               for g in _split_cin(_conv_weight(k1, 3, total, planes), cins)],
        "b1": b1.reshape(1, planes),
        "w2": _fold_w(_conv_weight(k2, 3, planes, planes), s2),
        "b2": b2.reshape(1, planes),
    }
    if stride != 1 or total != planes:
        ss, bs = _bn_params(kb3, planes)
        p["ws"] = [_fold_w(g, ss)
                   for g in _split_cin(_conv_weight(k3, 1, total, planes), cins)]
        p["bs"] = bs.reshape(1, planes)
    return p


def init_upblock(key, in_ch, out_ch, pass_ch):
    kw, kb, kf = jax.random.split(key, 3)
    s, b = _bn_params(kb, out_ch * 4)
    return {
        "up_w": _fold_w(_conv_weight(kw, 3, in_ch, out_ch * 4), s),
        "up_b": b.reshape(1, out_ch * 4),
        "follow": init_block(kf, (out_ch, pass_ch), out_ch, 1),
    }


def init_saliency_model(key, num_blocks=(1, 1, 1, 1), num_classes=2, stem_cin_pad=8):
    keys = jax.random.split(key, 12)
    s1, b1 = _bn_params(keys[1], 64)
    # stem conv weights are zero-padded 3 -> stem_cin_pad input channels so the
    # highest-resolution conv takes the lane-dense wide-K MXU path.
    w1 = _conv_weight(keys[0], 3, 3, 64)
    w1 = jnp.pad(w1, ((0, 0), (0, 0), (0, stem_cin_pad - 3), (0, 0)))
    params = {
        "conv1_w": _fold_w(w1, s1),
        "conv1_b": b1.reshape(1, 64),
        "conv1_cin": int(stem_cin_pad),
    }
    in_planes = 64
    layer_defs = [(64, num_blocks[0], 1), (128, num_blocks[1], 2),
                  (256, num_blocks[2], 2), (512, num_blocks[3], 2)]
    for li, (planes, nb, stride) in enumerate(layer_defs, start=1):
        strides = [stride] + [1] * (nb - 1)
        bkeys = jax.random.split(keys[1 + li], nb)
        blocks = []
        for bi, s in enumerate(strides):
            blocks.append(init_block(bkeys[bi], (in_planes,), planes, s))
            in_planes = planes
        params[f"layer{li}"] = blocks
    params["up4"] = init_upblock(keys[6], 512, 256, 256)
    params["up3"] = init_upblock(keys[7], 256, 128, 128)
    params["up2"] = init_upblock(keys[8], 128, 64, 64)
    params["embedding"] = jax.random.normal(keys[9], (num_classes, 512), jnp.float32)
    params["saliency_w"] = (jax.random.normal(keys[10], (2, 64), jnp.float32)
                            / 8.0).astype(ACT_DTYPE)           # (Cout=2, Cin=64)
    return params


# ---------------------------------------------------------------------------
# Forward pass (matches SaliencyModel.forward)
# ---------------------------------------------------------------------------
def saliency_forward(params, x_nchw, labels):
    x = jnp.transpose(x_nchw, (0, 2, 3, 1)).astype(ACT_DTYPE)   # NCHW -> NHWC bf16
    cin_pad = params["conv1_cin"]
    if x.shape[-1] < cin_pad:                                   # stem 3 -> 8 lanes
        x = jnp.pad(x, ((0, 0), (0, 0), (0, 0), (0, cin_pad - x.shape[-1])))

    h = conv_bn_relu(x, params["conv1_w"], params["conv1_b"])
    scale1 = h
    for bp in params["layer1"]:
        scale1 = block_forward(bp, [scale1])
    scale2 = scale1
    for bp in params["layer2"]:
        scale2 = block_forward(bp, [scale2])
    scale3 = scale2
    for bp in params["layer3"]:
        scale3 = block_forward(bp, [scale3])
    scale4 = scale3
    for bp in params["layer4"]:
        scale4 = block_forward(bp, [scale4])

    em = params["embedding"][labels.reshape(-1)]                # (N, 512)
    scale4 = embedding_gate(scale4, em)                         # sigmoid gating

    up3 = upblock_forward(params["up4"], scale4, scale3)
    up2 = upblock_forward(params["up3"], up3, scale2)
    up1 = upblock_forward(params["up2"], up2, scale1)

    return saliency_map(up1, params["saliency_w"])              # (N, 1, H, W) f32


if __name__ == "__main__":
    key = jax.random.PRNGKey(0)
    pkey, xkey, lkey = jax.random.split(key, 3)

    params = init_saliency_model(pkey, num_blocks=(1, 1, 1, 1), num_classes=2)

    N, H, W = 2, 16, 16
    x = jax.random.normal(xkey, (N, 3, H, W), jnp.float32)      # NCHW like PyTorch
    labels = jax.random.randint(lkey, (N,), 0, 2)

    out = saliency_forward(params, x, labels)
    out = jax.block_until_ready(out)
    assert out.shape == (N, 1, H, W), out.shape
    assert bool(jnp.all(jnp.isfinite(out)))
    print("KERNEL_OK")
</pallas_src>

<mosaic_0001>
module attributes {stable_mosaic.version = 11 : i64} {
  func.func @_conv_kernel(%arg0: i32, %arg1: memref<1x16x16x8xbf16, #tpu.memory_space<vmem>>, %arg2: memref<72x64xbf16, #tpu.memory_space<vmem>>, %arg3: memref<1x64xf32, #tpu.memory_space<vmem>>, %arg4: memref<1x16x16x64xbf16, #tpu.memory_space<vmem>>, %arg5: memref<18x18x8xbf16, #tpu.memory_space<vmem>>) attributes {dimension_semantics = [#tpu.dimension_semantics<parallel>], iteration_bounds = array<i64: 2>, scalar_prefetch = 0 : i64, scratch_operands = 1 : i64, tpu.core_type = #tpu.core_type<tc>, window_params = [{transform_indices = @transform_0, window_bounds = array<i64: 1, 16, 16, 8>}, {pipeline_mode = #tpu.pipeline_mode<synchronous>, transform_indices = @transform_1, window_bounds = array<i64: 72, 64>}, {pipeline_mode = #tpu.pipeline_mode<synchronous>, transform_indices = @transform_2, window_bounds = array<i64: 1, 64>}, {transform_indices = @transform_3, window_bounds = array<i64: 1, 16, 16, 64>}]} {
    %c0_i32 = arith.constant 0 : i32
    %0 = arith.cmpi eq, %arg0, %c0_i32 : i32
    %1 = arith.extui %0 : i1 to i32
    %c0_i32_0 = arith.constant 0 : i32
    %2 = arith.cmpi ne, %1, %c0_i32_0 : i32
    scf.if %2 {
      %cst_41 = arith.constant 0.000000e+00 : bf16
      %27 = vector.broadcast %cst_41 : bf16 to vector<18x18x8xbf16>
      %c0_42 = arith.constant 0 : index
      %c0_43 = arith.constant 0 : index
      %c0_44 = arith.constant 0 : index
      %28 = vector.load %arg5[%c0_42, %c0_43, %c0_44] : memref<18x18x8xbf16, #tpu.memory_space<vmem>>, vector<18x18x8xbf16>
      tpu.vector_store %arg5[%c0_42, %c0_43, %c0_44], %27 {strides = array<i32>} : memref<18x18x8xbf16, #tpu.memory_space<vmem>>, vector<18x18x8xbf16>,
    } else {
    }
    %c0 = arith.constant 0 : index
    %c0_1 = arith.constant 0 : index
    %c0_2 = arith.constant 0 : index
    %c0_3 = arith.constant 0 : index
    %3 = vector.load %arg1[%c0, %c0_1, %c0_2, %c0_3] : memref<1x16x16x8xbf16, #tpu.memory_space<vmem>>, vector<1x16x16x8xbf16>
    %4 = vector.shape_cast %3 : vector<1x16x16x8xbf16> to vector<16x16x8xbf16>
    %c1 = arith.constant 1 : index
    %c1_4 = arith.constant 1 : index
    %c0_5 = arith.constant 0 : index
    %5 = vector.load %arg5[%c1, %c1_4, %c0_5] : memref<18x18x8xbf16, #tpu.memory_space<vmem>>, vector<16x16x8xbf16>
    tpu.vector_store %arg5[%c1, %c1_4, %c0_5], %4 {strides = array<i32>} : memref<18x18x8xbf16, #tpu.memory_space<vmem>>, vector<16x16x8xbf16>,
    %c0_6 = arith.constant 0 : index
    %c0_7 = arith.constant 0 : index
    %c0_8 = arith.constant 0 : index
    %6 = vector.load %arg5[%c0_6, %c0_7, %c0_8] : memref<18x18x8xbf16, #tpu.memory_space<vmem>>, vector<16x16x8xbf16>
    %c0_9 = arith.constant 0 : index
    %c1_10 = arith.constant 1 : index
    %c0_11 = arith.constant 0 : index
    %7 = vector.load %arg5[%c0_9, %c1_10, %c0_11] : memref<18x18x8xbf16, #tpu.memory_space<vmem>>, vector<16x16x8xbf16>
    %c0_12 = arith.constant 0 : index
    %c2 = arith.constant 2 : index
    %c0_13 = arith.constant 0 : index
    %8 = vector.load %arg5[%c0_12, %c2, %c0_13] : memref<18x18x8xbf16, #tpu.memory_space<vmem>>, vector<16x16x8xbf16>
    %c1_14 = arith.constant 1 : index
    %c0_15 = arith.constant 0 : index
    %c0_16 = arith.constant 0 : index
    %9 = vector.load %arg5[%c1_14, %c0_15, %c0_16] : memref<18x18x8xbf16, #tpu.memory_space<vmem>>, vector<16x16x8xbf16>
    %c1_17 = arith.constant 1 : index
    %c1_18 = arith.constant 1 : index
    %c0_19 = arith.constant 0 : index
    %10 = vector.load %arg5[%c1_17, %c1_18, %c0_19] : memref<18x18x8xbf16, #tpu.memory_space<vmem>>, vector<16x16x8xbf16>
    %c1_20 = arith.constant 1 : index
    %c2_21 = arith.constant 2 : index
    %c0_22 = arith.constant 0 : index
    %11 = vector.load %arg5[%c1_20, %c2_21, %c0_22] : memref<18x18x8xbf16, #tpu.memory_space<vmem>>, vector<16x16x8xbf16>
    %c2_23 = arith.constant 2 : index
    %c0_24 = arith.constant 0 : index
    %c0_25 = arith.constant 0 : index
    %12 = vector.load %arg5[%c2_23, %c0_24, %c0_25] : memref<18x18x8xbf16, #tpu.memory_space<vmem>>, vector<16x16x8xbf16>
    %c2_26 = arith.constant 2 : index
    %c1_27 = arith.constant 1 : index
    %c0_28 = arith.constant 0 : index
    %13 = vector.load %arg5[%c2_26, %c1_27, %c0_28] : memref<18x18x8xbf16, #tpu.memory_space<vmem>>, vector<16x16x8xbf16>
    %c2_29 = arith.constant 2 : index
    %c2_30 = arith.constant 2 : index
    %c0_31 = arith.constant 0 : index
    %14 = vector.load %arg5[%c2_29, %c2_30, %c0_31] : memref<18x18x8xbf16, #tpu.memory_space<vmem>>, vector<16x16x8xbf16>
    %15 = tpu.concatenate %6, %7, %8, %9, %10, %11, %12, %13, %14 in 2 : vector<16x16x8xbf16>, vector<16x16x8xbf16>, vector<16x16x8xbf16>, vector<16x16x8xbf16>, vector<16x16x8xbf16>, vector<16x16x8xbf16>, vector<16x16x8xbf16>, vector<16x16x8xbf16>, vector<16x16x8xbf16> -> vector<16x16x72xbf16>
    %16 = vector.shape_cast %15 : vector<16x16x72xbf16> to vector<256x72xbf16>
    %c0_32 = arith.constant 0 : index
    %c0_33 = arith.constant 0 : index
    %17 = vector.load %arg2[%c0_32, %c0_33] : memref<72x64xbf16, #tpu.memory_space<vmem>>, vector<72x64xbf16>
    %cst = arith.constant dense<0.000000e+00> : vector<256x64xf32>
    %18 = tpu.matmul %16, %17, %cst {dimension_numbers = #tpu.dot_dimension_numbers<[1], [0], [0], [1], [0, 0, 1, 1], [], []>} : vector<256x72xbf16>, vector<72x64xbf16>, vector<256x64xf32> -> vector<256x64xf32>
    %c0_34 = arith.constant 0 : index
    %c0_35 = arith.constant 0 : index
    %19 = vector.load %arg3[%c0_34, %c0_35] : memref<1x64xf32, #tpu.memory_space<vmem>>, vector<1x64xf32>
    %20 = vector.broadcast %19 : vector<1x64xf32> to vector<256x64xf32>
    %21 = arith.addf %18, %20 : vector<256x64xf32>
    %cst_36 = arith.constant 0.000000e+00 : f32
    %22 = vector.broadcast %cst_36 : f32 to vector<256x64xf32>
    %23 = arith.maximumf %21, %22 : vector<256x64xf32>
    %24 = vector.shape_cast %23 : vector<256x64xf32> to vector<1x16x16x64xf32>
    %25 = arith.truncf %24 : vector<1x16x16x64xf32> to vector<1x16x16x64xbf16>
    %c0_37 = arith.constant 0 : index
    %c0_38 = arith.constant 0 : index
    %c0_39 = arith.constant 0 : index
    %c0_40 = arith.constant 0 : index
    %26 = vector.load %arg4[%c0_37, %c0_38, %c0_39, %c0_40] : memref<1x16x16x64xbf16, #tpu.memory_space<vmem>>, vector<1x16x16x64xbf16>
    tpu.vector_store %arg4[%c0_37, %c0_38, %c0_39, %c0_40], %25 {strides = array<i32>} : memref<1x16x16x64xbf16, #tpu.memory_space<vmem>>, vector<1x16x16x64xbf16>,
    return
  }
  func.func @transform_0(%arg0: i32) -> (i32, i32, i32, i32) {
    %c0_i32 = arith.constant 0 : i32
    %c0_i32_0 = arith.constant 0 : i32
    %c0_i32_1 = arith.constant 0 : i32
    %c0_i32_2 = arith.constant 0 : i32
    return %arg0, %c0_i32, %c0_i32_0, %c0_i32_1 : i32, i32, i32, i32
  }
  func.func @transform_1(%arg0: i32) -> (i32, i32) {
    %c0_i32 = arith.constant 0 : i32
    %c0_i32_0 = arith.constant 0 : i32
    %c0_i32_1 = arith.constant 0 : i32
    return %c0_i32, %c0_i32_0 : i32, i32
  }
  func.func @transform_2(%arg0: i32) -> (i32, i32) {
    %c0_i32 = arith.constant 0 : i32
    %c0_i32_0 = arith.constant 0 : i32
    %c0_i32_1 = arith.constant 0 : i32
    return %c0_i32, %c0_i32_0 : i32, i32
  }
  func.func @transform_3(%arg0: i32) -> (i32, i32, i32, i32) {
    %c0_i32 = arith.constant 0 : i32
    %c0_i32_0 = arith.constant 0 : i32
    %c0_i32_1 = arith.constant 0 : i32
    %c0_i32_2 = arith.constant 0 : i32
    return %arg0, %c0_i32, %c0_i32_0, %c0_i32_1 : i32, i32, i32, i32
  }
}

</mosaic_0001>

<llo_original>
// kernel: tpu_custom_call.1
$region0: #{tpu_custom_call.1}
  #allocation0 [shape = 'u32[]', space=smem, size = 0x4, offset = 0x4, fixed_abs, tag = 'smem constant byte address 0x4 - core index']
  #allocation1 [shape = 'u32[144,128]{1,0:T(1,128)}', space=vmem, size = 0x12000, scoped, tag = 'internal scratch']
  #allocation2 [shape = 'bf16[18,18,8]{2,1,0:T(8,128)(2,1)}', space=vmem, size = 0x1b000, scoped, tag = 'scratch operand']
  %s0 = inlined_call_operand.vmem [shape: bf16[2,16,16,8], index: 0, kind: input, shape index: {}]
  %s1 = inlined_call_operand.vmem [shape: bf16[72,64], index: 1, kind: input, shape index: {}]
  %s2 = inlined_call_operand.vmem [shape: f32[1,64], index: 2, kind: input, shape index: {}]
  %s3 = inlined_call_operand.hbm [shape: bf16[2,16,16,64], index: 3, kind: output, shape index: {}]
  %s4 = sld [smem:[#allocation0]]
  $region49: #{tpu_custom_call.1} parent=0
    _
  %s6 = ssub.s32 1, %s4
  %s7 = scalar_select 0, %s6, %s4
  $region1: #{tpu_custom_call.1} parent=0
    #allocation3 [shape = 'u8[131072]{0}', space=vmem, size = 0x20000, scoped, tag = 'output window, operand 0']
    #allocation4 [shape = 's32[2]{0}', space=sflag, size = 0x8, scoped, tag = 'scoped memory for tpu_custom_call.1']
    %8 = vsyncpa [#allocation4], 0
    %s9 = scalar_lea.sflag [#allocation4], 1
    %10 = vsyncpa %s9, 0
    loop: start=0, step=1, limit=4
    $region2: #{tpu_custom_call.1} parent=1 // loop_pre_header
      _
    $region3: #{tpu_custom_call.1} parent=1 // loop_header
      %s12 = sphi 0, %s16
      %p13 = scmp.ge.s32.totalorder %s12, 4
      %s22 = sphi 0, %s24
      %s25 = sphi 0, %s22
      %s26 = sphi 0, %s25
      %s42 = sphi 0, %s26
      %s46 = sphi 0, %s46
      %s48 = sphi 0, %s46
      %s49 = sphi 0, %s48
      %s63 = sphi 0, %s49
      %s67 = sphi 0, %s67
      %s69 = sphi 0, %s67
      %s70 = sphi 0, %s69
      %s84 = sphi 0, %s70
      %s90 = sphi 0, %s92
      %s93 = sphi 0, %s90
      %s94 = sphi 0, %s93
      %s110 = sphi 0, %s94
    $region4: #{tpu_custom_call.1} parent=1 // loop_header_branch
      %15 = sbr.rel (%p13) target = $region8
    $region5: #{tpu_custom_call.1} parent=1 // loop_body
      %s17 = ssub.s32 %s12, 1
      %s18 = ssub.s32 %s12, 2
      %s19 = sadd.s32 %s12, 1
      %s20 = ssub.s32 %s12, %s19
      %p21 = scmp.eq.s32.totalorder %s20, 0
      %s23 = sadd.s32 %s22, 1
      %s24 = scalar_select %p21, %s22, %s23
      %p27 = pneg %p21
      %p28 = scmp.eq.s32.totalorder %s12, 1
      %p29 = por %p27, %p28
      %p30 = scmp.ne.s32.totalorder %s22, %s25
      %p31 = scmp.eq.s32.totalorder %s12, 0
      %p32 = por %p30, %p31
      %p33 = scmp.ne.s32.totalorder %s22, %s25
      %p34 = scmp.eq.s32.totalorder %s17, 1
      %p35 = por %p33, %p34
      %p36 = scmp.ne.s32.totalorder %s25, %s26
      %p37 = scmp.eq.s32.totalorder %s17, 0
      %p38 = por %p36, %p37
      %p39 = scmp.ne.s32.totalorder %s25, %s26
      %p40 = scmp.eq.s32.totalorder %s18, 1
      %p41 = por %p39, %p40
      %p43 = scmp.ne.s32.totalorder %s26, %s42
      %p44 = scmp.eq.s32.totalorder %s18, 0
      %p45 = por %p43, %p44
      %s47 = sadd.s32 %s46, 1
      %p50 = scmp.eq.s32.totalorder %s12, 1
      %p51 = scmp.ne.s32.totalorder %s46, %s48
      %p52 = scmp.eq.s32.totalorder %s12, 0
      %p53 = por %p51, %p52
      %p54 = scmp.ne.s32.totalorder %s46, %s48
      %p55 = scmp.eq.s32.totalorder %s17, 1
      %p56 = por %p54, %p55
      %p57 = scmp.ne.s32.totalorder %s48, %s49
      %p58 = scmp.eq.s32.totalorder %s17, 0
      %p59 = por %p57, %p58
      %p60 = scmp.ne.s32.totalorder %s48, %s49
      %p61 = scmp.eq.s32.totalorder %s18, 1
      %p62 = por %p60, %p61
      %p64 = scmp.ne.s32.totalorder %s49, %s63
      %p65 = scmp.eq.s32.totalorder %s18, 0
      %p66 = por %p64, %p65
      %s68 = sadd.s32 %s67, 1
      %p71 = scmp.eq.s32.totalorder %s12, 1
      %p72 = scmp.ne.s32.totalorder %s67, %s69
      %p73 = scmp.eq.s32.totalorder %s12, 0
      %p74 = por %p72, %p73
      %p75 = scmp.ne.s32.totalorder %s67, %s69
      %p76 = scmp.eq.s32.totalorder %s17, 1
      %p77 = por %p75, %p76
      %p78 = scmp.ne.s32.totalorder %s69, %s70
      %p79 = scmp.eq.s32.totalorder %s17, 0
      %p80 = por %p78, %p79
      %p81 = scmp.ne.s32.totalorder %s69, %s70
      %p82 = scmp.eq.s32.totalorder %s18, 1
      %p83 = por %p81, %p82
      %p85 = scmp.ne.s32.totalorder %s70, %s84
      %p86 = scmp.eq.s32.totalorder %s18, 0
      %p87 = por %p85, %p86
      %s88 = ssub.s32 %s12, %s19
      %p89 = scmp.eq.s32.totalorder %s88, 0
      %s91 = sadd.s32 %s90, 1
      %s92 = scalar_select %p89, %s90, %s91
      %p95 = pneg %p89
      %p96 = scmp.eq.s32.totalorder %s12, 1
      %p97 = por %p95, %p96
      %p98 = scmp.ne.s32.totalorder %s90, %s93
      %p99 = scmp.eq.s32.totalorder %s12, 0
      %p100 = por %p98, %p99
      %p101 = scmp.ne.s32.totalorder %s90, %s93
      %p102 = scmp.eq.s32.totalorder %s17, 1
      %p103 = por %p101, %p102
      %p104 = scmp.ne.s32.totalorder %s93, %s94
      %p105 = scmp.eq.s32.totalorder %s17, 0
      %p106 = por %p104, %p105
      %p107 = scmp.ne.s32.totalorder %s93, %s94
      %p108 = scmp.eq.s32.totalorder %s18, 1
      %p109 = por %p107, %p108
      %p111 = scmp.ne.s32.totalorder %s94, %s110
      %p112 = scmp.eq.s32.totalorder %s18, 0
      %p113 = por %p111, %p112
      %p114 = scmp.le.s32.totalorder 1, %s12
      %p115 = scmp.lt.s32.totalorder %s12, 3
      %p116 = pnand %p114, %p115
      %p117 = pneg %p116
      // Predicated region
      $region9: #{tpu_custom_call.1} parent=5 // pred_check
        _
      $region10: #{tpu_custom_call.1} parent=5 // pred_check_branch
        %119 = sbr.rel (%p116) target = $region12
      $region11: #{tpu_custom_call.1} parent=5 // pred_region
        %s120 = ssub.s32 %s12, 1
        // Predicated region
        $region13: #{tpu_custom_call.1} parent=11 // pred_check
          %p121 = pneg %p59
        $region14: #{tpu_custom_call.1} parent=11 // pred_check_branch
          %123 = sbr.rel (%p121) target = $region16
        $region15: #{tpu_custom_call.1} parent=11 // pred_region
          _
        $region16: #{tpu_custom_call.1} parent=11 // pred_fallthru
          _
        // Predicated region
        $region17: #{tpu_custom_call.1} parent=11 // pred_check
          %p124 = pneg %p80
        $region18: #{tpu_custom_call.1} parent=11 // pred_check_branch
          %126 = sbr.rel (%p124) target = $region20
        $region19: #{tpu_custom_call.1} parent=11 // pred_region
          _
        $region20: #{tpu_custom_call.1} parent=11 // pred_fallthru
          _
      $region12: #{tpu_custom_call.1} parent=5 // pred_fallthru
        _
      %p127 = scmp.lt.s32.totalorder %s12, 2
      // Predicated region
      $region21: #{tpu_custom_call.1} parent=5 // pred_check
        %p128 = pneg %p127
      $region22: #{tpu_custom_call.1} parent=5 // pred_check_branch
        %130 = sbr.rel (%p128) target = $region24
      $region23: #{tpu_custom_call.1} parent=5 // pred_region
        // Predicated region
        $region25: #{tpu_custom_call.1} parent=23 // pred_check
          %p131 = pneg %p32
        $region26: #{tpu_custom_call.1} parent=23 // pred_check_branch
          %133 = sbr.rel (%p131) target = $region28
        $region27: #{tpu_custom_call.1} parent=23 // pred_region
          %p134 = scmp.lt.s32.totalorder %s12, 1
          %s135 = scalar_select %p134, %s12, 1
          %s136 = smul.addr %s135, 32
          %s137 = smul.addr %s136, 4
          %s138 = scalar_lea.vmem %s0, %s137
        $region28: #{tpu_custom_call.1} parent=23 // pred_fallthru
          _
      $region24: #{tpu_custom_call.1} parent=5 // pred_fallthru
        _
      %p139 = scmp.le.s32.totalorder 1, %s12
      %p140 = scmp.lt.s32.totalorder %s12, 3
      %p141 = pnand %p139, %p140
      %p142 = pneg %p141
      // Predicated region
      $region29: #{tpu_custom_call.1} parent=5 // pred_check
        _
      $region30: #{tpu_custom_call.1} parent=5 // pred_check_branch
        %144 = sbr.rel (%p141) target = $region32
      $region31: #{tpu_custom_call.1} parent=5 // pred_region
        %s145 = ssub.s32 %s12, 1
        %p146 = scmp.lt.s32.totalorder %s17, 1
        %s147 = scalar_select %p146, %s17, 1
        %s148 = smul.addr %s147, 32
        %s149 = smul.addr %s148, 4
        %s150 = scalar_lea.vmem %s0, %s149
        %p151 = pneg %p38
        %p152 = pneg %p35
        %p153 = pneg %p59
        %p154 = pneg %p56
        %p155 = pneg %p80
        %p156 = pneg %p77
        %p157 = pneg %p106
        %p158 = pneg %p103
        %s159 = sand.u32 %s93, 1
        %s160 = scalar_lea.sflag [#allocation4], %s159
        %s161 = sand.u32 %s93, 1
        %s162 = smul.addr %s161, 128
        %s163 = scalar_lea.vmem [#allocation3], %s162
        %p164 = scmp.lt.s32.totalorder %s17, 1
        %s165 = scalar_select %p164, %s17, 1
        %s166 = smul.addr %s165, 32
        %s167 = smul.addr %s166, 4
        %s168 = scalar_lea.vmem %s0, %s167
        %p170 = scmp.eq.s32.totalorder %s17, 0
        // Predicated region
        $region33: #{tpu_custom_call.1} parent=31 // pred_check
          %p171 = pneg %p170
        $region34: #{tpu_custom_call.1} parent=31 // pred_check_branch
          %173 = sbr.rel (%p171) target = $region36
        $region35: #{tpu_custom_call.1} parent=31 // pred_region
          %vm174 = vcmask 60416
          %175 = vst.msk [vmem:[#allocation2] sm:$0xf] %vm174, 0
          %176 = vst.msk [vmem:[#allocation2 + $0x4] sm:$0xf] %vm174, 0
          %vm177 = vcmask 57344
          %178 = vst.msk [vmem:[#allocation2 + $0x8] sm:$0x1] %vm177, 0
          %179 = vst.msk [vmem:[#allocation2 + $0xc] sm:$0xf] %vm174, 0
          %180 = vst.msk [vmem:[#allocation2 + $0x10] sm:$0xf] %vm174, 0
          %181 = vst.msk [vmem:[#allocation2 + $0x14] sm:$0x1] %vm177, 0
          %182 = vst.msk [vmem:[#allocation2 + $0x18] sm:$0xf] %vm174, 0
          %183 = vst.msk [vmem:[#allocation2 + $0x1c] sm:$0xf] %vm174, 0
          %184 = vst.msk [vmem:[#allocation2 + $0x20] sm:$0x1] %vm177, 0
          %185 = vst.msk [vmem:[#allocation2 + $0x24] sm:$0xf] %vm174, 0
          %186 = vst.msk [vmem:[#allocation2 + $0x28] sm:$0xf] %vm174, 0
          %187 = vst.msk [vmem:[#allocation2 + $0x2c] sm:$0x1] %vm177, 0
          %188 = vst.msk [vmem:[#allocation2 + $0x30] sm:$0xf] %vm174, 0
          %189 = vst.msk [vmem:[#allocation2 + $0x34] sm:$0xf] %vm174, 0
          %190 = vst.msk [vmem:[#allocation2 + $0x38] sm:$0x1] %vm177, 0
          %191 = vst.msk [vmem:[#allocation2 + $0x3c] sm:$0xf] %vm174, 0
          %192 = vst.msk [vmem:[#allocation2 + $0x40] sm:$0xf] %vm174, 0
          %193 = vst.msk [vmem:[#allocation2 + $0x44] sm:$0x1] %vm177, 0
          %194 = vst.msk [vmem:[#allocation2 + $0x48] sm:$0xf] %vm174, 0
          %195 = vst.msk [vmem:[#allocation2 + $0x4c] sm:$0xf] %vm174, 0
          %196 = vst.msk [vmem:[#allocation2 + $0x50] sm:$0x1] %vm177, 0
          %197 = vst.msk [vmem:[#allocation2 + $0x54] sm:$0xf] %vm174, 0
          %198 = vst.msk [vmem:[#allocation2 + $0x58] sm:$0xf] %vm174, 0
          %199 = vst.msk [vmem:[#allocation2 + $0x5c] sm:$0x1] %vm177, 0
          %200 = vst.msk [vmem:[#allocation2 + $0x60] sm:$0xf] %vm174, 0
          %201 = vst.msk [vmem:[#allocation2 + $0x64] sm:$0xf] %vm174, 0
          %202 = vst.msk [vmem:[#allocation2 + $0x68] sm:$0x1] %vm177, 0
          %203 = vst.msk [vmem:[#allocation2 + $0x6c] sm:$0xf] %vm174, 0
          %204 = vst.msk [vmem:[#allocation2 + $0x70] sm:$0xf] %vm174, 0
          %205 = vst.msk [vmem:[#allocation2 + $0x74] sm:$0x1] %vm177, 0
          %206 = vst.msk [vmem:[#allocation2 + $0x78] sm:$0xf] %vm174, 0
          %207 = vst.msk [vmem:[#allocation2 + $0x7c] sm:$0xf] %vm174, 0
          %208 = vst.msk [vmem:[#allocation2 + $0x80] sm:$0x1] %vm177, 0
          %209 = vst.msk [vmem:[#allocation2 + $0x84] sm:$0xf] %vm174, 0
          %210 = vst.msk [vmem:[#allocation2 + $0x88] sm:$0xf] %vm174, 0
          %211 = vst.msk [vmem:[#allocation2 + $0x8c] sm:$0x1] %vm177, 0
          %212 = vst.msk [vmem:[#allocation2 + $0x90] sm:$0xf] %vm174, 0
          %213 = vst.msk [vmem:[#allocation2 + $0x94] sm:$0xf] %vm174, 0
          %214 = vst.msk [vmem:[#allocation2 + $0x98] sm:$0x1] %vm177, 0
          %215 = vst.msk [vmem:[#allocation2 + $0x9c] sm:$0xf] %vm174, 0
          %216 = vst.msk [vmem:[#allocation2 + $0xa0] sm:$0xf] %vm174, 0
          %217 = vst.msk [vmem:[#allocation2 + $0xa4] sm:$0x1] %vm177, 0
          %218 = vst.msk [vmem:[#allocation2 + $0xa8] sm:$0xf] %vm174, 0
          %219 = vst.msk [vmem:[#allocation2 + $0xac] sm:$0xf] %vm174, 0
          %220 = vst.msk [vmem:[#allocation2 + $0xb0] sm:$0x1] %vm177, 0
          %221 = vst.msk [vmem:[#allocation2 + $0xb4] sm:$0xf] %vm174, 0
          %222 = vst.msk [vmem:[#allocation2 + $0xb8] sm:$0xf] %vm174, 0
          %223 = vst.msk [vmem:[#allocation2 + $0xbc] sm:$0x1] %vm177, 0
          %224 = vst.msk [vmem:[#allocation2 + $0xc0] sm:$0xf] %vm174, 0
          %225 = vst.msk [vmem:[#allocation2 + $0xc4] sm:$0xf] %vm174, 0
          %226 = vst.msk [vmem:[#allocation2 + $0xc8] sm:$0x1] %vm177, 0
          %227 = vst.msk [vmem:[#allocation2 + $0xcc] sm:$0xf] %vm174, 0
          %228 = vst.msk [vmem:[#allocation2 + $0xd0] sm:$0xf] %vm174, 0
          %229 = vst.msk [vmem:[#allocation2 + $0xd4] sm:$0x1] %vm177, 0
        $region36: #{tpu_custom_call.1} parent=31 // pred_fallthru
          _
        %v230 = vld [vmem:[%s168] sm:$0xf]
        %v231 = vld [vmem:[%s168 + $0x4] sm:$0xf]
        %v232 = vld [vmem:[%s168 + $0x8] sm:$0xf]
        %v233 = vld [vmem:[%s168 + $0xc] sm:$0xf]
        %v234 = vld [vmem:[%s168 + $0x10] sm:$0xf]
        %v235 = vld [vmem:[%s168 + $0x14] sm:$0xf]
        %v236 = vld [vmem:[%s168 + $0x18] sm:$0xf]
        %v237 = vld [vmem:[%s168 + $0x1c] sm:$0xf]
        %v238 = vld [vmem:[%s168 + $0x20] sm:$0xf]
        %v239 = vld [vmem:[%s168 + $0x24] sm:$0xf]
        %v240 = vld [vmem:[%s168 + $0x28] sm:$0xf]
        %v241 = vld [vmem:[%s168 + $0x2c] sm:$0xf]
        %v242 = vld [vmem:[%s168 + $0x30] sm:$0xf]
        %v243 = vld [vmem:[%s168 + $0x34] sm:$0xf]
        %v244 = vld [vmem:[%s168 + $0x38] sm:$0xf]
        %v245 = vld [vmem:[%s168 + $0x3c] sm:$0xf]
        %v246 = vld [vmem:[%s168 + $0x40] sm:$0xf]
        %v247 = vld [vmem:[%s168 + $0x44] sm:$0xf]
        %v248 = vld [vmem:[%s168 + $0x48] sm:$0xf]
        %v249 = vld [vmem:[%s168 + $0x4c] sm:$0xf]
        %v250 = vld [vmem:[%s168 + $0x50] sm:$0xf]
        %v251 = vld [vmem:[%s168 + $0x54] sm:$0xf]
        %v252 = vld [vmem:[%s168 + $0x58] sm:$0xf]
        %v253 = vld [vmem:[%s168 + $0x5c] sm:$0xf]
        %v254 = vld [vmem:[%s168 + $0x60] sm:$0xf]
        %v255 = vld [vmem:[%s168 + $0x64] sm:$0xf]
        %v256 = vld [vmem:[%s168 + $0x68] sm:$0xf]
        %v257 = vld [vmem:[%s168 + $0x6c] sm:$0xf]
        %v258 = vld [vmem:[%s168 + $0x70] sm:$0xf]
        %v259 = vld [vmem:[%s168 + $0x74] sm:$0xf]
        %v260 = vld [vmem:[%s168 + $0x78] sm:$0xf]
        %v261 = vld [vmem:[%s168 + $0x7c] sm:$0xf]
        %vm262 = vsmask.f32 256
        %vm263 = vsmask.f32 4368
        %vm264 = vmor %vm262, %vm263
        %v266 = vshrl.u32 %v230, 16
        %v268 = vrot.slane %v266, 7
        %v269 = vshll.u32 %v230, 16
        %v271 = vor.u32 %v268, %v269
        %v272 = vrot.slane %v268, 4
        %v274 = vshrl.u32 %v231, 16
        %v276 = vrot.slane %v274, 7
        %v277 = vshll.u32 %v231, 16
        %v279 = vor.u32 %v276, %v277
        %v280 = vsel %vm264, %v272, %v279
        %v281 = vrot.slane %v276, 4
        %v283 = vshrl.u32 %v232, 16
        %v285 = vrot.slane %v283, 7
        %v286 = vshll.u32 %v232, 16
        %v288 = vor.u32 %v285, %v286
        %v289 = vrot.slane %v285, 4
        %v291 = vshrl.u32 %v233, 16
        %v293 = vrot.slane %v291, 7
        %v294 = vshll.u32 %v233, 16
        %v296 = vor.u32 %v293, %v294
        %v297 = vsel %vm264, %v289, %v296
        %v298 = vrot.slane %v293, 4
        %v300 = vshrl.u32 %v234, 16
        %v302 = vrot.slane %v300, 7
        %v303 = vshll.u32 %v234, 16
        %v305 = vor.u32 %v302, %v303
        %v306 = vrot.slane %v302, 4
        %v308 = vshrl.u32 %v235, 16
        %v310 = vrot.slane %v308, 7
        %v311 = vshll.u32 %v235, 16
        %v313 = vor.u32 %v310, %v311
        %v314 = vsel %vm264, %v306, %v313
        %v315 = vrot.slane %v310, 4
        %v317 = vshrl.u32 %v236, 16
        %v319 = vrot.slane %v317, 7
        %v320 = vshll.u32 %v236, 16
        %v322 = vor.u32 %v319, %v320
        %v323 = vrot.slane %v319, 4
        %v325 = vshrl.u32 %v237, 16
        %v327 = vrot.slane %v325, 7
        %v328 = vshll.u32 %v237, 16
        %v330 = vor.u32 %v327, %v328
        %v331 = vsel %vm264, %v323, %v330
        %v332 = vrot.slane %v327, 4
        %v334 = vshrl.u32 %v238, 16
        %v336 = vrot.slane %v334, 7
        %v337 = vshll.u32 %v238, 16
        %v339 = vor.u32 %v336, %v337
        %v340 = vrot.slane %v336, 4
        %v342 = vshrl.u32 %v239, 16
        %v344 = vrot.slane %v342, 7
        %v345 = vshll.u32 %v239, 16
        %v347 = vor.u32 %v344, %v345
        %v348 = vsel %vm264, %v340, %v347
        %v349 = vrot.slane %v344, 4
        %v351 = vshrl.u32 %v240, 16
        %v353 = vrot.slane %v351, 7
        %v354 = vshll.u32 %v240, 16
        %v356 = vor.u32 %v353, %v354
        %v357 = vrot.slane %v353, 4
        %v359 = vshrl.u32 %v241, 16
        %v361 = vrot.slane %v359, 7
        %v362 = vshll.u32 %v241, 16
        %v364 = vor.u32 %v361, %v362
        %v365 = vsel %vm264, %v357, %v364
        %v366 = vrot.slane %v361, 4
        %v368 = vshrl.u32 %v242, 16
        %v370 = vrot.slane %v368, 7
        %v371 = vshll.u32 %v242, 16
        %v373 = vor.u32 %v370, %v371
        %v374 = vrot.slane %v370, 4
        %v376 = vshrl.u32 %v243, 16
        %v378 = vrot.slane %v376, 7
        %v379 = vshll.u32 %v243, 16
        %v381 = vor.u32 %v378, %v379
        %v382 = vsel %vm264, %v374, %v381
        %v383 = vrot.slane %v378, 4
        %v385 = vshrl.u32 %v244, 16
        %v387 = vrot.slane %v385, 7
        %v388 = vshll.u32 %v244, 16
        %v390 = vor.u32 %v387, %v388
        %v391 = vrot.slane %v387, 4
        %v393 = vshrl.u32 %v245, 16
        %v395 = vrot.slane %v393, 7
        %v396 = vshll.u32 %v245, 16
        %v398 = vor.u32 %v395, %v396
        %v399 = vsel %vm264, %v391, %v398
        %v400 = vrot.slane %v395, 4
        %v402 = vshrl.u32 %v246, 16
        %v404 = vrot.slane %v402, 7
        %v405 = vshll.u32 %v246, 16
        %v407 = vor.u32 %v404, %v405
        %v408 = vrot.slane %v404, 4
        %v410 = vshrl.u32 %v247, 16
        %v412 = vrot.slane %v410, 7
        %v413 = vshll.u32 %v247, 16
        %v415 = vor.u32 %v412, %v413
        %v416 = vsel %vm264, %v408, %v415
        %v417 = vrot.slane %v412, 4
        %v419 = vshrl.u32 %v248, 16
        %v421 = vrot.slane %v419, 7
        %v422 = vshll.u32 %v248, 16
        %v424 = vor.u32 %v421, %v422
        %v425 = vrot.slane %v421, 4
        %v427 = vshrl.u32 %v249, 16
        %v429 = vrot.slane %v427, 7
        %v430 = vshll.u32 %v249, 16
        %v432 = vor.u32 %v429, %v430
        %v433 = vsel %vm264, %v425, %v432
        %v434 = vrot.slane %v429, 4
        %v436 = vshrl.u32 %v250, 16
        %v438 = vrot.slane %v436, 7
        %v439 = vshll.u32 %v250, 16
        %v441 = vor.u32 %v438, %v439
        %v442 = vrot.slane %v438, 4
        %v444 = vshrl.u32 %v251, 16
        %v446 = vrot.slane %v444, 7
        %v447 = vshll.u32 %v251, 16
        %v449 = vor.u32 %v446, %v447
        %v450 = vsel %vm264, %v442, %v449
        %v451 = vrot.slane %v446, 4
        %v453 = vshrl.u32 %v252, 16
        %v455 = vrot.slane %v453, 7
        %v456 = vshll.u32 %v252, 16
        %v458 = vor.u32 %v455, %v456
        %v459 = vrot.slane %v455, 4
        %v461 = vshrl.u32 %v253, 16
        %v463 = vrot.slane %v461, 7
        %v464 = vshll.u32 %v253, 16
        %v466 = vor.u32 %v463, %v464
        %v467 = vsel %vm264, %v459, %v466
        %v468 = vrot.slane %v463, 4
        %v470 = vshrl.u32 %v254, 16
        %v472 = vrot.slane %v470, 7
        %v473 = vshll.u32 %v254, 16
        %v475 = vor.u32 %v472, %v473
        %v476 = vrot.slane %v472, 4
        %v478 = vshrl.u32 %v255, 16
        %v480 = vrot.slane %v478, 7
        %v481 = vshll.u32 %v255, 16
        %v483 = vor.u32 %v480, %v481
        %v484 = vsel %vm264, %v476, %v483
        %v485 = vrot.slane %v480, 4
        %v487 = vshrl.u32 %v256, 16
        %v489 = vrot.slane %v487, 7
        %v490 = vshll.u32 %v256, 16
        %v492 = vor.u32 %v489, %v490
        %v493 = vrot.slane %v489, 4
        %v495 = vshrl.u32 %v257, 16
        %v497 = vrot.slane %v495, 7
        %v498 = vshll.u32 %v257, 16
        %v500 = vor.u32 %v497, %v498
        %v501 = vsel %vm264, %v493, %v500
        %v502 = vrot.slane %v497, 4
        %v504 = vshrl.u32 %v258, 16
        %v506 = vrot.slane %v504, 7
        %v507 = vshll.u32 %v258, 16
        %v509 = vor.u32 %v506, %v507
        %v510 = vrot.slane %v506, 4
        %v512 = vshrl.u32 %v259, 16
        %v514 = vrot.slane %v512, 7
        %v515 = vshll.u32 %v259, 16
        %v517 = vor.u32 %v514, %v515
        %v518 = vsel %vm264, %v510, %v517
        %v519 = vrot.slane %v514, 4
        %v521 = vshrl.u32 %v260, 16
        %v523 = vrot.slane %v521, 7
        %v524 = vshll.u32 %v260, 16
        %v526 = vor.u32 %v523, %v524
        %v527 = vrot.slane %v523, 4
        %v529 = vshrl.u32 %v261, 16
        %v531 = vrot.slane %v529, 7
        %v532 = vshll.u32 %v261, 16
        %v534 = vor.u32 %v531, %v532
        %v535 = vsel %vm264, %v527, %v534
        %v536 = vrot.slane %v531, 4
        %s585 = scalar_lea.vmem [#allocation2], 12
        %vm586 = vcmask 60416
        %vm587 = vsmask.f32 7938
        %vm588 = vmand %vm586, %vm587
        %v589 = vld [vmem:[%s585] sm:$0xf]
        %v590 = vsel %vm588, %v271, %v589
        %591 = vst [vmem:[%s585] sm:$0xf] %v590
        %vm592 = vcmask 60416
        %593 = vst.msk [vmem:[%s585 + $0x4] sm:$0xf] %vm592, %v280
        %vm594 = vcmask 57344
        %vm595 = vmand %vm594, %vm262
        %v596 = vld [vmem:[%s585 + $0x8] sm:$0x1]
        %v597 = vsel %vm595, %v281, %v596
        %598 = vst [vmem:[%s585 + $0x8] sm:$0x1] %v597
        %v599 = vld [vmem:[%s585 + $0xc] sm:$0xf]
        %v600 = vsel %vm588, %v288, %v599
        %601 = vst [vmem:[%s585 + $0xc] sm:$0xf] %v600
        %602 = vst.msk [vmem:[%s585 + $0x10] sm:$0xf] %vm592, %v297
        %v603 = vld [vmem:[%s585 + $0x14] sm:$0x1]
        %v604 = vsel %vm595, %v298, %v603
        %605 = vst [vmem:[%s585 + $0x14] sm:$0x1] %v604
        %v606 = vld [vmem:[%s585 + $0x18] sm:$0xf]
        %v607 = vsel %vm588, %v305, %v606
        %608 = vst [vmem:[%s585 + $0x18] sm:$0xf] %v607
        %609 = vst.msk [vmem:[%s585 + $0x1c] sm:$0xf] %vm592, %v314
        %v610 = vld [vmem:[%s585 + $0x20] sm:$0x1]
        %v611 = vsel %vm595, %v315, %v610
        %612 = vst [vmem:[%s585 + $0x20] sm:$0x1] %v611
        %v613 = vld [vmem:[%s585 + $0x24] sm:$0xf]
        %v614 = vsel %vm588, %v322, %v613
        %615 = vst [vmem:[%s585 + $0x24] sm:$0xf] %v614
        %616 = vst.msk [vmem:[%s585 + $0x28] sm:$0xf] %vm592, %v331
        %v617 = vld [vmem:[%s585 + $0x2c] sm:$0x1]
        %v618 = vsel %vm595, %v332, %v617
        %619 = vst [vmem:[%s585 + $0x2c] sm:$0x1] %v618
        %v620 = vld [vmem:[%s585 + $0x30] sm:$0xf]
        %v621 = vsel %vm588, %v339, %v620
        %622 = vst [vmem:[%s585 + $0x30] sm:$0xf] %v621
        %623 = vst.msk [vmem:[%s585 + $0x34] sm:$0xf] %vm592, %v348
        %v624 = vld [vmem:[%s585 + $0x38] sm:$0x1]
        %v625 = vsel %vm595, %v349, %v624
        %626 = vst [vmem:[%s585 + $0x38] sm:$0x1] %v625
        %v627 = vld [vmem:[%s585 + $0x3c] sm:$0xf]
        %v628 = vsel %vm588, %v356, %v627
        %629 = vst [vmem:[%s585 + $0x3c] sm:$0xf] %v628
        %630 = vst.msk [vmem:[%s585 + $0x40] sm:$0xf] %vm592, %v365
        %v631 = vld [vmem:[%s585 + $0x44] sm:$0x1]
        %v632 = vsel %vm595, %v366, %v631
        %633 = vst [vmem:[%s585 + $0x44] sm:$0x1] %v632
        %v634 = vld [vmem:[%s585 + $0x48] sm:$0xf]
        %v635 = vsel %vm588, %v373, %v634
        %636 = vst [vmem:[%s585 + $0x48] sm:$0xf] %v635
        %637 = vst.msk [vmem:[%s585 + $0x4c] sm:$0xf] %vm592, %v382
        %v638 = vld [vmem:[%s585 + $0x50] sm:$0x1]
        %v639 = vsel %vm595, %v383, %v638
        %640 = vst [vmem:[%s585 + $0x50] sm:$0x1] %v639
        %v641 = vld [vmem:[%s585 + $0x54] sm:$0xf]
        %v642 = vsel %vm588, %v390, %v641
        %643 = vst [vmem:[%s585 + $0x54] sm:$0xf] %v642
        %644 = vst.msk [vmem:[%s585 + $0x58] sm:$0xf] %vm592, %v399
        %v645 = vld [vmem:[%s585 + $0x5c] sm:$0x1]
        %v646 = vsel %vm595, %v400, %v645
        %647 = vst [vmem:[%s585 + $0x5c] sm:$0x1] %v646
        %v648 = vld [vmem:[%s585 + $0x60] sm:$0xf]
        %v649 = vsel %vm588, %v407, %v648
        %650 = vst [vmem:[%s585 + $0x60] sm:$0xf] %v649
        %651 = vst.msk [vmem:[%s585 + $0x64] sm:$0xf] %vm592, %v416
        %v652 = vld [vmem:[%s585 + $0x68] sm:$0x1]
        %v653 = vsel %vm595, %v417, %v652
        %654 = vst [vmem:[%s585 + $0x68] sm:$0x1] %v653
        %v655 = vld [vmem:[%s585 + $0x6c] sm:$0xf]
        %v656 = vsel %vm588, %v424, %v655
        %657 = vst [vmem:[%s585 + $0x6c] sm:$0xf] %v656
        %658 = vst.msk [vmem:[%s585 + $0x70] sm:$0xf] %vm592, %v433
        %v659 = vld [vmem:[%s585 + $0x74] sm:$0x1]
        %v660 = vsel %vm595, %v434, %v659
        %661 = vst [vmem:[%s585 + $0x74] sm:$0x1] %v660
        %v662 = vld [vmem:[%s585 + $0x78] sm:$0xf]
        %v663 = vsel %vm588, %v441, %v662
        %664 = vst [vmem:[%s585 + $0x78] sm:$0xf] %v663
        %665 = vst.msk [vmem:[%s585 + $0x7c] sm:$0xf] %vm592, %v450
        %v666 = vld [vmem:[%s585 + $0x80] sm:$0x1]
        %v667 = vsel %vm595, %v451, %v666
        %668 = vst [vmem:[%s585 + $0x80] sm:$0x1] %v667
        %v669 = vld [vmem:[%s585 + $0x84] sm:$0xf]
        %v670 = vsel %vm588, %v458, %v669
        %671 = vst [vmem:[%s585 + $0x84] sm:$0xf] %v670
        %672 = vst.msk [vmem:[%s585 + $0x88] sm:$0xf] %vm592, %v467
        %v673 = vld [vmem:[%s585 + $0x8c] sm:$0x1]
        %v674 = vsel %vm595, %v468, %v673
        %675 = vst [vmem:[%s585 + $0x8c] sm:$0x1] %v674
        %v676 = vld [vmem:[%s585 + $0x90] sm:$0xf]
        %v677 = vsel %vm588, %v475, %v676
        %678 = vst [vmem:[%s585 + $0x90] sm:$0xf] %v677
        %679 = vst.msk [vmem:[%s585 + $0x94] sm:$0xf] %vm592, %v484
        %v680 = vld [vmem:[%s585 + $0x98] sm:$0x1]
        %v681 = vsel %vm595, %v485, %v680
        %682 = vst [vmem:[%s585 + $0x98] sm:$0x1] %v681
        %v683 = vld [vmem:[%s585 + $0x9c] sm:$0xf]
        %v684 = vsel %vm588, %v492, %v683
        %685 = vst [vmem:[%s585 + $0x9c] sm:$0xf] %v684
        %686 = vst.msk [vmem:[%s585 + $0xa0] sm:$0xf] %vm592, %v501
        %v687 = vld [vmem:[%s585 + $0xa4] sm:$0x1]
        %v688 = vsel %vm595, %v502, %v687
        %689 = vst [vmem:[%s585 + $0xa4] sm:$0x1] %v688
        %v690 = vld [vmem:[%s585 + $0xa8] sm:$0xf]
        %v691 = vsel %vm588, %v509, %v690
        %692 = vst [vmem:[%s585 + $0xa8] sm:$0xf] %v691
        %693 = vst.msk [vmem:[%s585 + $0xac] sm:$0xf] %vm592, %v518
        %v694 = vld [vmem:[%s585 + $0xb0] sm:$0x1]
        %v695 = vsel %vm595, %v519, %v694
        %696 = vst [vmem:[%s585 + $0xb0] sm:$0x1] %v695
        %v697 = vld [vmem:[%s585 + $0xb4] sm:$0xf]
        %v698 = vsel %vm588, %v526, %v697
        %699 = vst [vmem:[%s585 + $0xb4] sm:$0xf] %v698
        %700 = vst.msk [vmem:[%s585 + $0xb8] sm:$0xf] %vm592, %v535
        %v701 = vld [vmem:[%s585 + $0xbc] sm:$0x1]
        %v702 = vsel %vm595, %v536, %v701
        %703 = vst [vmem:[%s585 + $0xbc] sm:$0x1] %v702
        %v704 = vld [vmem:[#allocation2] sm:$0xf]
        %v705 = vld [vmem:[#allocation2 + $0x4] sm:$0xf]
        %v706 = vld [vmem:[#allocation2 + $0xc] sm:$0xf]
        %v707 = vld [vmem:[#allocation2 + $0x10] sm:$0xf]
        %v708 = vld [vmem:[#allocation2 + $0x18] sm:$0xf]
        %v709 = vld [vmem:[#allocation2 + $0x1c] sm:$0xf]
        %v710 = vld [vmem:[#allocation2 + $0x24] sm:$0xf]
        %v711 = vld [vmem:[#allocation2 + $0x28] sm:$0xf]
        %v712 = vld [vmem:[#allocation2 + $0x30] sm:$0xf]
        %v713 = vld [vmem:[#allocation2 + $0x34] sm:$0xf]
        %v714 = vld [vmem:[#allocation2 + $0x3c] sm:$0xf]
        %v715 = vld [vmem:[#allocation2 + $0x40] sm:$0xf]
        %v716 = vld [vmem:[#allocation2 + $0x48] sm:$0xf]
        %v717 = vld [vmem:[#allocation2 + $0x4c] sm:$0xf]
        %v718 = vld [vmem:[#allocation2 + $0x54] sm:$0xf]
        %v719 = vld [vmem:[#allocation2 + $0x58] sm:$0xf]
        %v720 = vld [vmem:[#allocation2 + $0x60] sm:$0xf]
        %v721 = vld [vmem:[#allocation2 + $0x64] sm:$0xf]
        %v722 = vld [vmem:[#allocation2 + $0x6c] sm:$0xf]
        %v723 = vld [vmem:[#allocation2 + $0x70] sm:$0xf]
        %v724 = vld [vmem:[#allocation2 + $0x78] sm:$0xf]
        %v725 = vld [vmem:[#allocation2 + $0x7c] sm:$0xf]
        %v726 = vld [vmem:[#allocation2 + $0x84] sm:$0xf]
        %v727 = vld [vmem:[#allocation2 + $0x88] sm:$0xf]
        %v728 = vld [vmem:[#allocation2 + $0x90] sm:$0xf]
        %v729 = vld [vmem:[#allocation2 + $0x94] sm:$0xf]
        %v730 = vld [vmem:[#allocation2 + $0x9c] sm:$0xf]
        %v731 = vld [vmem:[#allocation2 + $0xa0] sm:$0xf]
        %v732 = vld [vmem:[#allocation2 + $0xa8] sm:$0xf]
        %v733 = vld [vmem:[#allocation2 + $0xac] sm:$0xf]
        %v734 = vld [vmem:[#allocation2 + $0xb4] sm:$0xf]
        %v735 = vld [vmem:[#allocation2 + $0xb8] sm:$0xf]
        %v736 = vld [vmem:[#allocation2 + $0x8] sm:$0x1]
        %v737 = vld [vmem:[#allocation2 + $0x14] sm:$0x1]
        %v738 = vld [vmem:[#allocation2 + $0x20] sm:$0x1]
        %v739 = vld [vmem:[#allocation2 + $0x2c] sm:$0x1]
        %v740 = vld [vmem:[#allocation2 + $0x38] sm:$0x1]
        %v741 = vld [vmem:[#allocation2 + $0x44] sm:$0x1]
        %v742 = vld [vmem:[#allocation2 + $0x50] sm:$0x1]
        %v743 = vld [vmem:[#allocation2 + $0x5c] sm:$0x1]
        %v744 = vld [vmem:[#allocation2 + $0x68] sm:$0x1]
        %v745 = vld [vmem:[#allocation2 + $0x74] sm:$0x1]
        %v746 = vld [vmem:[#allocation2 + $0x80] sm:$0x1]
        %v747 = vld [vmem:[#allocation2 + $0x8c] sm:$0x1]
        %v748 = vld [vmem:[#allocation2 + $0x98] sm:$0x1]
        %v749 = vld [vmem:[#allocation2 + $0xa4] sm:$0x1]
        %v750 = vld [vmem:[#allocation2 + $0xb0] sm:$0x1]
        %v751 = vld [vmem:[#allocation2 + $0xbc] sm:$0x1]
        %v752 = vld [vmem:[#allocation2] sm:$0xe]
        %v753 = vld [vmem:[#allocation2 + $0xc] sm:$0xe]
        %v754 = vld [vmem:[#allocation2 + $0x18] sm:$0xe]
        %v755 = vld [vmem:[#allocation2 + $0x24] sm:$0xe]
        %v756 = vld [vmem:[#allocation2 + $0x30] sm:$0xe]
        %v757 = vld [vmem:[#allocation2 + $0x3c] sm:$0xe]
        %v758 = vld [vmem:[#allocation2 + $0x48] sm:$0xe]
        %v759 = vld [vmem:[#allocation2 + $0x54] sm:$0xe]
        %v760 = vld [vmem:[#allocation2 + $0x60] sm:$0xe]
        %v761 = vld [vmem:[#allocation2 + $0x6c] sm:$0xe]
        %v762 = vld [vmem:[#allocation2 + $0x78] sm:$0xe]
        %v763 = vld [vmem:[#allocation2 + $0x84] sm:$0xe]
        %v764 = vld [vmem:[#allocation2 + $0x90] sm:$0xe]
        %v765 = vld [vmem:[#allocation2 + $0x9c] sm:$0xe]
        %v766 = vld [vmem:[#allocation2 + $0xa8] sm:$0xe]
        %v767 = vld [vmem:[#allocation2 + $0xb4] sm:$0xe]
        %v768 = vld [vmem:[%s585] sm:$0xf]
        %v769 = vld [vmem:[%s585 + $0x4] sm:$0xf]
        %v770 = vld [vmem:[%s585 + $0xc] sm:$0xf]
        %v771 = vld [vmem:[%s585 + $0x10] sm:$0xf]
        %v772 = vld [vmem:[%s585 + $0x18] sm:$0xf]
        %v773 = vld [vmem:[%s585 + $0x1c] sm:$0xf]
        %v774 = vld [vmem:[%s585 + $0x24] sm:$0xf]
        %v775 = vld [vmem:[%s585 + $0x28] sm:$0xf]
        %v776 = vld [vmem:[%s585 + $0x30] sm:$0xf]
        %v777 = vld [vmem:[%s585 + $0x34] sm:$0xf]
        %v778 = vld [vmem:[%s585 + $0x3c] sm:$0xf]
        %v779 = vld [vmem:[%s585 + $0x40] sm:$0xf]
        %v780 = vld [vmem:[%s585 + $0x48] sm:$0xf]
        %v781 = vld [vmem:[%s585 + $0x4c] sm:$0xf]
        %v782 = vld [vmem:[%s585 + $0x54] sm:$0xf]
        %v783 = vld [vmem:[%s585 + $0x58] sm:$0xf]
        %v784 = vld [vmem:[%s585 + $0x60] sm:$0xf]
        %v785 = vld [vmem:[%s585 + $0x64] sm:$0xf]
        %v786 = vld [vmem:[%s585 + $0x6c] sm:$0xf]
        %v787 = vld [vmem:[%s585 + $0x70] sm:$0xf]
        %v788 = vld [vmem:[%s585 + $0x78] sm:$0xf]
        %v789 = vld [vmem:[%s585 + $0x7c] sm:$0xf]
        %v790 = vld [vmem:[%s585 + $0x84] sm:$0xf]
        %v791 = vld [vmem:[%s585 + $0x88] sm:$0xf]
        %v792 = vld [vmem:[%s585 + $0x90] sm:$0xf]
        %v793 = vld [vmem:[%s585 + $0x94] sm:$0xf]
        %v794 = vld [vmem:[%s585 + $0x9c] sm:$0xf]
        %v795 = vld [vmem:[%s585 + $0xa0] sm:$0xf]
        %v796 = vld [vmem:[%s585 + $0xa8] sm:$0xf]
        %v797 = vld [vmem:[%s585 + $0xac] sm:$0xf]
        %v798 = vld [vmem:[%s585 + $0xb4] sm:$0xf]
        %v799 = vld [vmem:[%s585 + $0xb8] sm:$0xf]
        %v800 = vld [vmem:[%s585 + $0x8] sm:$0x1]
        %v801 = vld [vmem:[%s585 + $0x14] sm:$0x1]
        %v802 = vld [vmem:[%s585 + $0x20] sm:$0x1]
        %v803 = vld [vmem:[%s585 + $0x2c] sm:$0x1]
        %v804 = vld [vmem:[%s585 + $0x38] sm:$0x1]
        %v805 = vld [vmem:[%s585 + $0x44] sm:$0x1]
        %v806 = vld [vmem:[%s585 + $0x50] sm:$0x1]
        %v807 = vld [vmem:[%s585 + $0x5c] sm:$0x1]
        %v808 = vld [vmem:[%s585 + $0x68] sm:$0x1]
        %v809 = vld [vmem:[%s585 + $0x74] sm:$0x1]
        %v810 = vld [vmem:[%s585 + $0x80] sm:$0x1]
        %v811 = vld [vmem:[%s585 + $0x8c] sm:$0x1]
        %v812 = vld [vmem:[%s585 + $0x98] sm:$0x1]
        %v813 = vld [vmem:[%s585 + $0xa4] sm:$0x1]
        %v814 = vld [vmem:[%s585 + $0xb0] sm:$0x1]
        %v815 = vld [vmem:[%s585 + $0xbc] sm:$0x1]
        %v816 = vld [vmem:[%s585] sm:$0xe]
        %v817 = vld [vmem:[%s585 + $0xc] sm:$0xe]
        %v818 = vld [vmem:[%s585 + $0x18] sm:$0xe]
        %v819 = vld [vmem:[%s585 + $0x24] sm:$0xe]
        %v820 = vld [vmem:[%s585 + $0x30] sm:$0xe]
        %v821 = vld [vmem:[%s585 + $0x3c] sm:$0xe]
        %v822 = vld [vmem:[%s585 + $0x48] sm:$0xe]
        %v823 = vld [vmem:[%s585 + $0x54] sm:$0xe]
        %v824 = vld [vmem:[%s585 + $0x60] sm:$0xe]
        %v825 = vld [vmem:[%s585 + $0x6c] sm:$0xe]
        %v826 = vld [vmem:[%s585 + $0x78] sm:$0xe]
        %v827 = vld [vmem:[%s585 + $0x84] sm:$0xe]
        %v828 = vld [vmem:[%s585 + $0x90] sm:$0xe]
        %v829 = vld [vmem:[%s585 + $0x9c] sm:$0xe]
        %v830 = vld [vmem:[%s585 + $0xa8] sm:$0xe]
        %v831 = vld [vmem:[%s585 + $0xb4] sm:$0xe]
        %s832 = scalar_lea.vmem [#allocation2], 24
        %v833 = vld [vmem:[%s832] sm:$0xf]
        %v834 = vld [vmem:[%s832 + $0x4] sm:$0xf]
        %v835 = vld [vmem:[%s832 + $0xc] sm:$0xf]
        %v836 = vld [vmem:[%s832 + $0x10] sm:$0xf]
        %v837 = vld [vmem:[%s832 + $0x18] sm:$0xf]
        %v838 = vld [vmem:[%s832 + $0x1c] sm:$0xf]
        %v839 = vld [vmem:[%s832 + $0x24] sm:$0xf]
        %v840 = vld [vmem:[%s832 + $0x28] sm:$0xf]
        %v841 = vld [vmem:[%s832 + $0x30] sm:$0xf]
        %v842 = vld [vmem:[%s832 + $0x34] sm:$0xf]
        %v843 = vld [vmem:[%s832 + $0x3c] sm:$0xf]
        %v844 = vld [vmem:[%s832 + $0x40] sm:$0xf]
        %v845 = vld [vmem:[%s832 + $0x48] sm:$0xf]
        %v846 = vld [vmem:[%s832 + $0x4c] sm:$0xf]
        %v847 = vld [vmem:[%s832 + $0x54] sm:$0xf]
        %v848 = vld [vmem:[%s832 + $0x58] sm:$0xf]
        %v849 = vld [vmem:[%s832 + $0x60] sm:$0xf]
        %v850 = vld [vmem:[%s832 + $0x64] sm:$0xf]
        %v851 = vld [vmem:[%s832 + $0x6c] sm:$0xf]
        %v852 = vld [vmem:[%s832 + $0x70] sm:$0xf]
        %v853 = vld [vmem:[%s832 + $0x78] sm:$0xf]
        %v854 = vld [vmem:[%s832 + $0x7c] sm:$0xf]
        %v855 = vld [vmem:[%s832 + $0x84] sm:$0xf]
        %v856 = vld [vmem:[%s832 + $0x88] sm:$0xf]
        %v857 = vld [vmem:[%s832 + $0x90] sm:$0xf]
        %v858 = vld [vmem:[%s832 + $0x94] sm:$0xf]
        %v859 = vld [vmem:[%s832 + $0x9c] sm:$0xf]
        %v860 = vld [vmem:[%s832 + $0xa0] sm:$0xf]
        %v861 = vld [vmem:[%s832 + $0xa8] sm:$0xf]
        %v862 = vld [vmem:[%s832 + $0xac] sm:$0xf]
        %v863 = vld [vmem:[%s832 + $0xb4] sm:$0xf]
        %v864 = vld [vmem:[%s832 + $0xb8] sm:$0xf]
        %v865 = vld [vmem:[%s832 + $0x8] sm:$0x1]
        %v866 = vld [vmem:[%s832 + $0x14] sm:$0x1]
        %v867 = vld [vmem:[%s832 + $0x20] sm:$0x1]
        %v868 = vld [vmem:[%s832 + $0x2c] sm:$0x1]
        %v869 = vld [vmem:[%s832 + $0x38] sm:$0x1]
        %v870 = vld [vmem:[%s832 + $0x44] sm:$0x1]
        %v871 = vld [vmem:[%s832 + $0x50] sm:$0x1]
        %v872 = vld [vmem:[%s832 + $0x5c] sm:$0x1]
        %v873 = vld [vmem:[%s832 + $0x68] sm:$0x1]
        %v874 = vld [vmem:[%s832 + $0x74] sm:$0x1]
        %v875 = vld [vmem:[%s832 + $0x80] sm:$0x1]
        %v876 = vld [vmem:[%s832 + $0x8c] sm:$0x1]
        %v877 = vld [vmem:[%s832 + $0x98] sm:$0x1]
        %v878 = vld [vmem:[%s832 + $0xa4] sm:$0x1]
        %v879 = vld [vmem:[%s832 + $0xb0] sm:$0x1]
        %v880 = vld [vmem:[%s832 + $0xbc] sm:$0x1]
        %v881 = vld [vmem:[%s832] sm:$0xe]
        %v882 = vld [vmem:[%s832 + $0xc] sm:$0xe]
        %v883 = vld [vmem:[%s832 + $0x18] sm:$0xe]
        %v884 = vld [vmem:[%s832 + $0x24] sm:$0xe]
        %v885 = vld [vmem:[%s832 + $0x30] sm:$0xe]
        %v886 = vld [vmem:[%s832 + $0x3c] sm:$0xe]
        %v887 = vld [vmem:[%s832 + $0x48] sm:$0xe]
        %v888 = vld [vmem:[%s832 + $0x54] sm:$0xe]
        %v889 = vld [vmem:[%s832 + $0x60] sm:$0xe]
        %v890 = vld [vmem:[%s832 + $0x6c] sm:$0xe]
        %v891 = vld [vmem:[%s832 + $0x78] sm:$0xe]
        %v892 = vld [vmem:[%s832 + $0x84] sm:$0xe]
        %v893 = vld [vmem:[%s832 + $0x90] sm:$0xe]
        %v894 = vld [vmem:[%s832 + $0x9c] sm:$0xe]
        %v895 = vld [vmem:[%s832 + $0xa8] sm:$0xe]
        %v896 = vld [vmem:[%s832 + $0xb4] sm:$0xe]
        %v929 = vunpack.c.l.b16 %v704
        %v930 = vunpack.c.l.b16 %v705
        %v931 = vunpack.c.l.b16 %v706
        %v932 = vunpack.c.l.b16 %v707
        %v933 = vunpack.c.l.b16 %v708
        %v934 = vunpack.c.l.b16 %v709
        %v935 = vunpack.c.l.b16 %v710
        %v936 = vunpack.c.l.b16 %v711
        %v937 = vunpack.c.l.b16 %v712
        %v938 = vunpack.c.l.b16 %v713
        %v939 = vunpack.c.l.b16 %v714
        %v940 = vunpack.c.l.b16 %v715
        %v941 = vunpack.c.l.b16 %v716
        %v942 = vunpack.c.l.b16 %v717
        %v943 = vunpack.c.l.b16 %v718
        %v944 = vunpack.c.l.b16 %v719
        %v945 = vunpack.c.l.b16 %v720
        %v946 = vunpack.c.l.b16 %v721
        %v947 = vunpack.c.l.b16 %v722
        %v948 = vunpack.c.l.b16 %v723
        %v949 = vunpack.c.l.b16 %v724
        %v950 = vunpack.c.l.b16 %v725
        %v951 = vunpack.c.l.b16 %v726
        %v952 = vunpack.c.l.b16 %v727
        %v953 = vunpack.c.l.b16 %v728
        %v954 = vunpack.c.l.b16 %v729
        %v955 = vunpack.c.l.b16 %v730
        %v956 = vunpack.c.l.b16 %v731
        %v957 = vunpack.c.l.b16 %v732
        %v958 = vunpack.c.l.b16 %v733
        %v959 = vunpack.c.l.b16 %v734
        %v960 = vunpack.c.l.b16 %v735
        %v961 = vpack.c.b16 %v930, %v929
        %v962 = vpack.c.b16 %v932, %v931
        %v963 = vpack.c.b16 %v934, %v933
        %v964 = vpack.c.b16 %v936, %v935
        %v965 = vpack.c.b16 %v938, %v937
        %v966 = vpack.c.b16 %v940, %v939
        %v967 = vpack.c.b16 %v942, %v941
        %v968 = vpack.c.b16 %v944, %v943
        %v969 = vpack.c.b16 %v946, %v945
        %v970 = vpack.c.b16 %v948, %v947
        %v971 = vpack.c.b16 %v950, %v949
        %v972 = vpack.c.b16 %v952, %v951
        %v973 = vpack.c.b16 %v954, %v953
        %v974 = vpack.c.b16 %v956, %v955
        %v975 = vpack.c.b16 %v958, %v957
        %v976 = vpack.c.b16 %v960, %v959
        %v993 = vunpack.c.l.b16 %v736
        %v994 = vunpack.c.l.b16 %v737
        %v995 = vunpack.c.l.b16 %v738
        %v996 = vunpack.c.l.b16 %v739
        %v997 = vunpack.c.l.b16 %v740
        %v998 = vunpack.c.l.b16 %v741
        %v999 = vunpack.c.l.b16 %v742
        %v1000 = vunpack.c.l.b16 %v743
        %v1001 = vunpack.c.l.b16 %v744
        %v1002 = vunpack.c.l.b16 %v745
        %v1003 = vunpack.c.l.b16 %v746
        %v1004 = vunpack.c.l.b16 %v747
        %v1005 = vunpack.c.l.b16 %v748
        %v1006 = vunpack.c.l.b16 %v749
        %v1007 = vunpack.c.l.b16 %v750
        %v1008 = vunpack.c.l.b16 %v751
        %v1009 = vpack.c.b16 %v993, %v993
        %v1010 = vpack.c.b16 %v994, %v994
        %v1011 = vpack.c.b16 %v995, %v995
        %v1012 = vpack.c.b16 %v996, %v996
        %v1013 = vpack.c.b16 %v997, %v997
        %v1014 = vpack.c.b16 %v998, %v998
        %v1015 = vpack.c.b16 %v999, %v999
        %v1016 = vpack.c.b16 %v1000, %v1000
        %v1017 = vpack.c.b16 %v1001, %v1001
        %v1018 = vpack.c.b16 %v1002, %v1002
        %v1019 = vpack.c.b16 %v1003, %v1003
        %v1020 = vpack.c.b16 %v1004, %v1004
        %v1021 = vpack.c.b16 %v1005, %v1005
        %v1022 = vpack.c.b16 %v1006, %v1006
        %v1023 = vpack.c.b16 %v1007, %v1007
        %v1024 = vpack.c.b16 %v1008, %v1008
        %vm1025 = vsmask.f32 7424
        %v1027 = vshrl.u32 %v961, 16
        %v1029 = vshll.u32 %v961, 16
        %v1031 = vrot.slane %v1029, 1
        %v1032 = vor.u32 %v1027, %v1031
        %v1034 = vshll.u32 %v1009, 16
        %v1036 = vrot.slane %v1034, 1
        %v1037 = vsel %vm1025, %v1032, %v1036
        %v1039 = vshrl.u32 %v962, 16
        %v1041 = vshll.u32 %v962, 16
        %v1043 = vrot.slane %v1041, 1
        %v1044 = vor.u32 %v1039, %v1043
        %v1046 = vshll.u32 %v1010, 16
        %v1048 = vrot.slane %v1046, 1
        %v1049 = vsel %vm1025, %v1044, %v1048
        %v1051 = vshrl.u32 %v963, 16
        %v1053 = vshll.u32 %v963, 16
        %v1055 = vrot.slane %v1053, 1
        %v1056 = vor.u32 %v1051, %v1055
        %v1058 = vshll.u32 %v1011, 16
        %v1060 = vrot.slane %v1058, 1
        %v1061 = vsel %vm1025, %v1056, %v1060
        %v1063 = vshrl.u32 %v964, 16
        %v1065 = vshll.u32 %v964, 16
        %v1067 = vrot.slane %v1065, 1
        %v1068 = vor.u32 %v1063, %v1067
        %v1070 = vshll.u32 %v1012, 16
        %v1072 = vrot.slane %v1070, 1
        %v1073 = vsel %vm1025, %v1068, %v1072
        %v1075 = vshrl.u32 %v965, 16
        %v1077 = vshll.u32 %v965, 16
        %v1079 = vrot.slane %v1077, 1
        %v1080 = vor.u32 %v1075, %v1079
        %v1082 = vshll.u32 %v1013, 16
        %v1084 = vrot.slane %v1082, 1
        %v1085 = vsel %vm1025, %v1080, %v1084
        %v1087 = vshrl.u32 %v966, 16
        %v1089 = vshll.u32 %v966, 16
        %v1091 = vrot.slane %v1089, 1
        %v1092 = vor.u32 %v1087, %v1091
        %v1094 = vshll.u32 %v1014, 16
        %v1096 = vrot.slane %v1094, 1
        %v1097 = vsel %vm1025, %v1092, %v1096
        %v1099 = vshrl.u32 %v967, 16
        %v1101 = vshll.u32 %v967, 16
        %v1103 = vrot.slane %v1101, 1
        %v1104 = vor.u32 %v1099, %v1103
        %v1106 = vshll.u32 %v1015, 16
        %v1108 = vrot.slane %v1106, 1
        %v1109 = vsel %vm1025, %v1104, %v1108
        %v1111 = vshrl.u32 %v968, 16
        %v1113 = vshll.u32 %v968, 16
        %v1115 = vrot.slane %v1113, 1
        %v1116 = vor.u32 %v1111, %v1115
        %v1118 = vshll.u32 %v1016, 16
        %v1120 = vrot.slane %v1118, 1
        %v1121 = vsel %vm1025, %v1116, %v1120
        %v1123 = vshrl.u32 %v969, 16
        %v1125 = vshll.u32 %v969, 16
        %v1127 = vrot.slane %v1125, 1
        %v1128 = vor.u32 %v1123, %v1127
        %v1130 = vshll.u32 %v1017, 16
        %v1132 = vrot.slane %v1130, 1
        %v1133 = vsel %vm1025, %v1128, %v1132
        %v1135 = vshrl.u32 %v970, 16
        %v1137 = vshll.u32 %v970, 16
        %v1139 = vrot.slane %v1137, 1
        %v1140 = vor.u32 %v1135, %v1139
        %v1142 = vshll.u32 %v1018, 16
        %v1144 = vrot.slane %v1142, 1
        %v1145 = vsel %vm1025, %v1140, %v1144
        %v1147 = vshrl.u32 %v971, 16
        %v1149 = vshll.u32 %v971, 16
        %v1151 = vrot.slane %v1149, 1
        %v1152 = vor.u32 %v1147, %v1151
        %v1154 = vshll.u32 %v1019, 16
        %v1156 = vrot.slane %v1154, 1
        %v1157 = vsel %vm1025, %v1152, %v1156
        %v1159 = vshrl.u32 %v972, 16
        %v1161 = vshll.u32 %v972, 16
        %v1163 = vrot.slane %v1161, 1
        %v1164 = vor.u32 %v1159, %v1163
        %v1166 = vshll.u32 %v1020, 16
        %v1168 = vrot.slane %v1166, 1
        %v1169 = vsel %vm1025, %v1164, %v1168
        %v1171 = vshrl.u32 %v973, 16
        %v1173 = vshll.u32 %v973, 16
        %v1175 = vrot.slane %v1173, 1
        %v1176 = vor.u32 %v1171, %v1175
        %v1178 = vshll.u32 %v1021, 16
        %v1180 = vrot.slane %v1178, 1
        %v1181 = vsel %vm1025, %v1176, %v1180
        %v1183 = vshrl.u32 %v974, 16
        %v1185 = vshll.u32 %v974, 16
        %v1187 = vrot.slane %v1185, 1
        %v1188 = vor.u32 %v1183, %v1187
        %v1190 = vshll.u32 %v1022, 16
        %v1192 = vrot.slane %v1190, 1
        %v1193 = vsel %vm1025, %v1188, %v1192
        %v1195 = vshrl.u32 %v975, 16
        %v1197 = vshll.u32 %v975, 16
        %v1199 = vrot.slane %v1197, 1
        %v1200 = vor.u32 %v1195, %v1199
        %v1202 = vshll.u32 %v1023, 16
        %v1204 = vrot.slane %v1202, 1
        %v1205 = vsel %vm1025, %v1200, %v1204
        %v1207 = vshrl.u32 %v976, 16
        %v1209 = vshll.u32 %v976, 16
        %v1211 = vrot.slane %v1209, 1
        %v1212 = vor.u32 %v1207, %v1211
        %v1214 = vshll.u32 %v1024, 16
        %v1216 = vrot.slane %v1214, 1
        %v1217 = vsel %vm1025, %v1212, %v1216
        %1218 = vrot.lane.b32.xlu0 %v1037, 8
        %v1219 = vpop.permute.xlu0 %1218
        %1220 = vrot.lane.b32.xlu0 %v1049, 8
        %v1221 = vpop.permute.xlu0 %1220
        %1222 = vrot.lane.b32.xlu0 %v1061, 8
        %v1223 = vpop.permute.xlu0 %1222
        %1224 = vrot.lane.b32.xlu0 %v1073, 8
        %v1225 = vpop.permute.xlu0 %1224
        %1226 = vrot.lane.b32.xlu0 %v1085, 8
        %v1227 = vpop.permute.xlu0 %1226
        %1228 = vrot.lane.b32.xlu0 %v1097, 8
        %v1229 = vpop.permute.xlu0 %1228
        %1230 = vrot.lane.b32.xlu0 %v1109, 8
        %v1231 = vpop.permute.xlu0 %1230
        %1232 = vrot.lane.b32.xlu0 %v1121, 8
        %v1233 = vpop.permute.xlu0 %1232
        %1234 = vrot.lane.b32.xlu0 %v1133, 8
        %v1235 = vpop.permute.xlu0 %1234
        %1236 = vrot.lane.b32.xlu0 %v1145, 8
        %v1237 = vpop.permute.xlu0 %1236
        %1238 = vrot.lane.b32.xlu0 %v1157, 8
        %v1239 = vpop.permute.xlu0 %1238
        %1240 = vrot.lane.b32.xlu0 %v1169, 8
        %v1241 = vpop.permute.xlu0 %1240
        %1242 = vrot.lane.b32.xlu0 %v1181, 8
        %v1243 = vpop.permute.xlu0 %1242
        %1244 = vrot.lane.b32.xlu0 %v1193, 8
        %v1245 = vpop.permute.xlu0 %1244
        %1246 = vrot.lane.b32.xlu0 %v1205, 8
        %v1247 = vpop.permute.xlu0 %1246
        %1248 = vrot.lane.b32.xlu0 %v1217, 8
        %v1249 = vpop.permute.xlu0 %1248
        %v1266 = vunpack.c.l.b16 %v752
        %v1267 = vunpack.c.l.b16 %v753
        %v1268 = vunpack.c.l.b16 %v754
        %v1269 = vunpack.c.l.b16 %v755
        %v1270 = vunpack.c.l.b16 %v756
        %v1271 = vunpack.c.l.b16 %v757
        %v1272 = vunpack.c.l.b16 %v758
        %v1273 = vunpack.c.l.b16 %v759
        %v1274 = vunpack.c.l.b16 %v760
        %v1275 = vunpack.c.l.b16 %v761
        %v1276 = vunpack.c.l.b16 %v762
        %v1277 = vunpack.c.l.b16 %v763
        %v1278 = vunpack.c.l.b16 %v764
        %v1279 = vunpack.c.l.b16 %v765
        %v1280 = vunpack.c.l.b16 %v766
        %v1281 = vunpack.c.l.b16 %v767
        %v1282 = vpack.c.b16 %v930, %v1266
        %v1283 = vpack.c.b16 %v932, %v1267
        %v1284 = vpack.c.b16 %v934, %v1268
        %v1285 = vpack.c.b16 %v936, %v1269
        %v1286 = vpack.c.b16 %v938, %v1270
        %v1287 = vpack.c.b16 %v940, %v1271
        %v1288 = vpack.c.b16 %v942, %v1272
        %v1289 = vpack.c.b16 %v944, %v1273
        %v1290 = vpack.c.b16 %v946, %v1274
        %v1291 = vpack.c.b16 %v948, %v1275
        %v1292 = vpack.c.b16 %v950, %v1276
        %v1293 = vpack.c.b16 %v952, %v1277
        %v1294 = vpack.c.b16 %v954, %v1278
        %v1295 = vpack.c.b16 %v956, %v1279
        %v1296 = vpack.c.b16 %v958, %v1280
        %v1297 = vpack.c.b16 %v960, %v1281
        %vm1298 = vcmask 1046528
        %v1299 = vrot.slane %v1282, 1
        %v1300 = vrot.slane %v1009, 1
        %v1301 = vsel %vm1298, %v1299, %v1300
        %v1302 = vrot.slane %v1283, 1
        %v1303 = vrot.slane %v1010, 1
        %v1304 = vsel %vm1298, %v1302, %v1303
        %v1305 = vrot.slane %v1284, 1
        %v1306 = vrot.slane %v1011, 1
        %v1307 = vsel %vm1298, %v1305, %v1306
        %v1308 = vrot.slane %v1285, 1
        %v1309 = vrot.slane %v1012, 1
        %v1310 = vsel %vm1298, %v1308, %v1309
        %v1311 = vrot.slane %v1286, 1
        %v1312 = vrot.slane %v1013, 1
        %v1313 = vsel %vm1298, %v1311, %v1312
        %v1314 = vrot.slane %v1287, 1
        %v1315 = vrot.slane %v1014, 1
        %v1316 = vsel %vm1298, %v1314, %v1315
        %v1317 = vrot.slane %v1288, 1
        %v1318 = vrot.slane %v1015, 1
        %v1319 = vsel %vm1298, %v1317, %v1318
        %v1320 = vrot.slane %v1289, 1
        %v1321 = vrot.slane %v1016, 1
        %v1322 = vsel %vm1298, %v1320, %v1321
        %v1323 = vrot.slane %v1290, 1
        %v1324 = vrot.slane %v1017, 1
        %v1325 = vsel %vm1298, %v1323, %v1324
        %v1326 = vrot.slane %v1291, 1
        %v1327 = vrot.slane %v1018, 1
        %v1328 = vsel %vm1298, %v1326, %v1327
        %v1329 = vrot.slane %v1292, 1
        %v1330 = vrot.slane %v1019, 1
        %v1331 = vsel %vm1298, %v1329, %v1330
        %v1332 = vrot.slane %v1293, 1
        %v1333 = vrot.slane %v1020, 1
        %v1334 = vsel %vm1298, %v1332, %v1333
        %v1335 = vrot.slane %v1294, 1
        %v1336 = vrot.slane %v1021, 1
        %v1337 = vsel %vm1298, %v1335, %v1336
        %v1338 = vrot.slane %v1295, 1
        %v1339 = vrot.slane %v1022, 1
        %v1340 = vsel %vm1298, %v1338, %v1339
        %v1341 = vrot.slane %v1296, 1
        %v1342 = vrot.slane %v1023, 1
        %v1343 = vsel %vm1298, %v1341, %v1342
        %v1344 = vrot.slane %v1297, 1
        %v1345 = vrot.slane %v1024, 1
        %v1346 = vsel %vm1298, %v1344, %v1345
        %1347 = vrot.lane.b32.xlu0 %v1301, 16
        %v1348 = vpop.permute.xlu0 %1347
        %1349 = vrot.lane.b32.xlu0 %v1304, 16
        %v1350 = vpop.permute.xlu0 %1349
        %1351 = vrot.lane.b32.xlu0 %v1307, 16
        %v1352 = vpop.permute.xlu0 %1351
        %1353 = vrot.lane.b32.xlu0 %v1310, 16
        %v1354 = vpop.permute.xlu0 %1353
        %1355 = vrot.lane.b32.xlu0 %v1313, 16
        %v1356 = vpop.permute.xlu0 %1355
        %1357 = vrot.lane.b32.xlu0 %v1316, 16
        %v1358 = vpop.permute.xlu0 %1357
        %1359 = vrot.lane.b32.xlu0 %v1319, 16
        %v1360 = vpop.permute.xlu0 %1359
        %1361 = vrot.lane.b32.xlu0 %v1322, 16
        %v1362 = vpop.permute.xlu0 %1361
        %1363 = vrot.lane.b32.xlu0 %v1325, 16
        %v1364 = vpop.permute.xlu0 %1363
        %1365 = vrot.lane.b32.xlu0 %v1328, 16
        %v1366 = vpop.permute.xlu0 %1365
        %1367 = vrot.lane.b32.xlu0 %v1331, 16
        %v1368 = vpop.permute.xlu0 %1367
        %1369 = vrot.lane.b32.xlu0 %v1334, 16
        %v1370 = vpop.permute.xlu0 %1369
        %1371 = vrot.lane.b32.xlu0 %v1337, 16
        %v1372 = vpop.permute.xlu0 %1371
        %1373 = vrot.lane.b32.xlu0 %v1340, 16
        %v1374 = vpop.permute.xlu0 %1373
        %1375 = vrot.lane.b32.xlu0 %v1343, 16
        %v1376 = vpop.permute.xlu0 %1375
        %1377 = vrot.lane.b32.xlu0 %v1346, 16
        %v1378 = vpop.permute.xlu0 %1377
        %v1411 = vunpack.c.l.b16 %v768
        %v1412 = vunpack.c.l.b16 %v769
        %v1413 = vunpack.c.l.b16 %v770
        %v1414 = vunpack.c.l.b16 %v771
        %v1415 = vunpack.c.l.b16 %v772
        %v1416 = vunpack.c.l.b16 %v773
        %v1417 = vunpack.c.l.b16 %v774
        %v1418 = vunpack.c.l.b16 %v775
        %v1419 = vunpack.c.l.b16 %v776
        %v1420 = vunpack.c.l.b16 %v777
        %v1421 = vunpack.c.l.b16 %v778
        %v1422 = vunpack.c.l.b16 %v779
        %v1423 = vunpack.c.l.b16 %v780
        %v1424 = vunpack.c.l.b16 %v781
        %v1425 = vunpack.c.l.b16 %v782
        %v1426 = vunpack.c.l.b16 %v783
        %v1427 = vunpack.c.l.b16 %v784
        %v1428 = vunpack.c.l.b16 %v785
        %v1429 = vunpack.c.l.b16 %v786
        %v1430 = vunpack.c.l.b16 %v787
        %v1431 = vunpack.c.l.b16 %v788
        %v1432 = vunpack.c.l.b16 %v789
        %v1433 = vunpack.c.l.b16 %v790
        %v1434 = vunpack.c.l.b16 %v791
        %v1435 = vunpack.c.l.b16 %v792
        %v1436 = vunpack.c.l.b16 %v793
        %v1437 = vunpack.c.l.b16 %v794
        %v1438 = vunpack.c.l.b16 %v795
        %v1439 = vunpack.c.l.b16 %v796
        %v1440 = vunpack.c.l.b16 %v797
        %v1441 = vunpack.c.l.b16 %v798
        %v1442 = vunpack.c.l.b16 %v799
        %v1443 = vpack.c.b16 %v1412, %v1411
        %v1444 = vpack.c.b16 %v1414, %v1413
        %v1445 = vpack.c.b16 %v1416, %v1415
        %v1446 = vpack.c.b16 %v1418, %v1417
        %v1447 = vpack.c.b16 %v1420, %v1419
        %v1448 = vpack.c.b16 %v1422, %v1421
        %v1449 = vpack.c.b16 %v1424, %v1423
        %v1450 = vpack.c.b16 %v1426, %v1425
        %v1451 = vpack.c.b16 %v1428, %v1427
        %v1452 = vpack.c.b16 %v1430, %v1429
        %v1453 = vpack.c.b16 %v1432, %v1431
        %v1454 = vpack.c.b16 %v1434, %v1433
        %v1455 = vpack.c.b16 %v1436, %v1435
        %v1456 = vpack.c.b16 %v1438, %v1437
        %v1457 = vpack.c.b16 %v1440, %v1439
        %v1458 = vpack.c.b16 %v1442, %v1441
        %1459 = vrot.lane.b32.xlu0 %v1443, 24
        %v1460 = vpop.permute.xlu0 %1459
        %1461 = vrot.lane.b32.xlu0 %v1444, 24
        %v1462 = vpop.permute.xlu0 %1461
        %1463 = vrot.lane.b32.xlu0 %v1445, 24
        %v1464 = vpop.permute.xlu0 %1463
        %1465 = vrot.lane.b32.xlu0 %v1446, 24
        %v1466 = vpop.permute.xlu0 %1465
        %1467 = vrot.lane.b32.xlu0 %v1447, 24
        %v1468 = vpop.permute.xlu0 %1467
        %1469 = vrot.lane.b32.xlu0 %v1448, 24
        %v1470 = vpop.permute.xlu0 %1469
        %1471 = vrot.lane.b32.xlu0 %v1449, 24
        %v1472 = vpop.permute.xlu0 %1471
        %1473 = vrot.lane.b32.xlu0 %v1450, 24
        %v1474 = vpop.permute.xlu0 %1473
        %1475 = vrot.lane.b32.xlu0 %v1451, 24
        %v1476 = vpop.permute.xlu0 %1475
        %1477 = vrot.lane.b32.xlu0 %v1452, 24
        %v1478 = vpop.permute.xlu0 %1477
        %1479 = vrot.lane.b32.xlu0 %v1453, 24
        %v1480 = vpop.permute.xlu0 %1479
        %1481 = vrot.lane.b32.xlu0 %v1454, 24
        %v1482 = vpop.permute.xlu0 %1481
        %1483 = vrot.lane.b32.xlu0 %v1455, 24
        %v1484 = vpop.permute.xlu0 %1483
        %1485 = vrot.lane.b32.xlu0 %v1456, 24
        %v1486 = vpop.permute.xlu0 %1485
        %1487 = vrot.lane.b32.xlu0 %v1457, 24
        %v1488 = vpop.permute.xlu0 %1487
        %1489 = vrot.lane.b32.xlu0 %v1458, 24
        %v1490 = vpop.permute.xlu0 %1489
        %v1507 = vunpack.c.l.b16 %v800
        %v1508 = vunpack.c.l.b16 %v801
        %v1509 = vunpack.c.l.b16 %v802
        %v1510 = vunpack.c.l.b16 %v803
        %v1511 = vunpack.c.l.b16 %v804
        %v1512 = vunpack.c.l.b16 %v805
        %v1513 = vunpack.c.l.b16 %v806
        %v1514 = vunpack.c.l.b16 %v807
        %v1515 = vunpack.c.l.b16 %v808
        %v1516 = vunpack.c.l.b16 %v809
        %v1517 = vunpack.c.l.b16 %v810
        %v1518 = vunpack.c.l.b16 %v811
        %v1519 = vunpack.c.l.b16 %v812
        %v1520 = vunpack.c.l.b16 %v813
        %v1521 = vunpack.c.l.b16 %v814
        %v1522 = vunpack.c.l.b16 %v815
        %v1523 = vpack.c.b16 %v1507, %v1507
        %v1524 = vpack.c.b16 %v1508, %v1508
        %v1525 = vpack.c.b16 %v1509, %v1509
        %v1526 = vpack.c.b16 %v1510, %v1510
        %v1527 = vpack.c.b16 %v1511, %v1511
        %v1528 = vpack.c.b16 %v1512, %v1512
        %v1529 = vpack.c.b16 %v1513, %v1513
        %v1530 = vpack.c.b16 %v1514, %v1514
        %v1531 = vpack.c.b16 %v1515, %v1515
        %v1532 = vpack.c.b16 %v1516, %v1516
        %v1533 = vpack.c.b16 %v1517, %v1517
        %v1534 = vpack.c.b16 %v1518, %v1518
        %v1535 = vpack.c.b16 %v1519, %v1519
        %v1536 = vpack.c.b16 %v1520, %v1520
        %v1537 = vpack.c.b16 %v1521, %v1521
        %v1538 = vpack.c.b16 %v1522, %v1522
        %v1540 = vshrl.u32 %v1443, 16
        %v1542 = vshll.u32 %v1443, 16
        %v1544 = vrot.slane %v1542, 1
        %v1545 = vor.u32 %v1540, %v1544
        %v1547 = vshll.u32 %v1523, 16
        %v1549 = vrot.slane %v1547, 1
        %v1550 = vsel %vm1025, %v1545, %v1549
        %v1552 = vshrl.u32 %v1444, 16
        %v1554 = vshll.u32 %v1444, 16
        %v1556 = vrot.slane %v1554, 1
        %v1557 = vor.u32 %v1552, %v1556
        %v1559 = vshll.u32 %v1524, 16
        %v1561 = vrot.slane %v1559, 1
        %v1562 = vsel %vm1025, %v1557, %v1561
        %v1564 = vshrl.u32 %v1445, 16
        %v1566 = vshll.u32 %v1445, 16
        %v1568 = vrot.slane %v1566, 1
        %v1569 = vor.u32 %v1564, %v1568
        %v1571 = vshll.u32 %v1525, 16
        %v1573 = vrot.slane %v1571, 1
        %v1574 = vsel %vm1025, %v1569, %v1573
        %v1576 = vshrl.u32 %v1446, 16
        %v1578 = vshll.u32 %v1446, 16
        %v1580 = vrot.slane %v1578, 1
        %v1581 = vor.u32 %v1576, %v1580
        %v1583 = vshll.u32 %v1526, 16
        %v1585 = vrot.slane %v1583, 1
        %v1586 = vsel %vm1025, %v1581, %v1585
        %v1588 = vshrl.u32 %v1447, 16
        %v1590 = vshll.u32 %v1447, 16
        %v1592 = vrot.slane %v1590, 1
        %v1593 = vor.u32 %v1588, %v1592
        %v1595 = vshll.u32 %v1527, 16
        %v1597 = vrot.slane %v1595, 1
        %v1598 = vsel %vm1025, %v1593, %v1597
        %v1600 = vshrl.u32 %v1448, 16
        %v1602 = vshll.u32 %v1448, 16
        %v1604 = vrot.slane %v1602, 1
        %v1605 = vor.u32 %v1600, %v1604
        %v1607 = vshll.u32 %v1528, 16
        %v1609 = vrot.slane %v1607, 1
        %v1610 = vsel %vm1025, %v1605, %v1609
        %v1612 = vshrl.u32 %v1449, 16
        %v1614 = vshll.u32 %v1449, 16
        %v1616 = vrot.slane %v1614, 1
        %v1617 = vor.u32 %v1612, %v1616
        %v1619 = vshll.u32 %v1529, 16
        %v1621 = vrot.slane %v1619, 1
        %v1622 = vsel %vm1025, %v1617, %v1621
        %v1624 = vshrl.u32 %v1450, 16
        %v1626 = vshll.u32 %v1450, 16
        %v1628 = vrot.slane %v1626, 1
        %v1629 = vor.u32 %v1624, %v1628
        %v1631 = vshll.u32 %v1530, 16
        %v1633 = vrot.slane %v1631, 1
        %v1634 = vsel %vm1025, %v1629, %v1633
        %v1636 = vshrl.u32 %v1451, 16
        %v1638 = vshll.u32 %v1451, 16
        %v1640 = vrot.slane %v1638, 1
        %v1641 = vor.u32 %v1636, %v1640
        %v1643 = vshll.u32 %v1531, 16
        %v1645 = vrot.slane %v1643, 1
        %v1646 = vsel %vm1025, %v1641, %v1645
        %v1648 = vshrl.u32 %v1452, 16
        %v1650 = vshll.u32 %v1452, 16
        %v1652 = vrot.slane %v1650, 1
        %v1653 = vor.u32 %v1648, %v1652
        %v1655 = vshll.u32 %v1532, 16
        %v1657 = vrot.slane %v1655, 1
        %v1658 = vsel %vm1025, %v1653, %v1657
        %v1660 = vshrl.u32 %v1453, 16
        %v1662 = vshll.u32 %v1453, 16
        %v1664 = vrot.slane %v1662, 1
        %v1665 = vor.u32 %v1660, %v1664
        %v1667 = vshll.u32 %v1533, 16
        %v1669 = vrot.slane %v1667, 1
        %v1670 = vsel %vm1025, %v1665, %v1669
        %v1672 = vshrl.u32 %v1454, 16
        %v1674 = vshll.u32 %v1454, 16
        %v1676 = vrot.slane %v1674, 1
        %v1677 = vor.u32 %v1672, %v1676
        %v1679 = vshll.u32 %v1534, 16
        %v1681 = vrot.slane %v1679, 1
        %v1682 = vsel %vm1025, %v1677, %v1681
        %v1684 = vshrl.u32 %v1455, 16
        %v1686 = vshll.u32 %v1455, 16
        %v1688 = vrot.slane %v1686, 1
        %v1689 = vor.u32 %v1684, %v1688
        %v1691 = vshll.u32 %v1535, 16
        %v1693 = vrot.slane %v1691, 1
        %v1694 = vsel %vm1025, %v1689, %v1693
        %v1696 = vshrl.u32 %v1456, 16
        %v1698 = vshll.u32 %v1456, 16
        %v1700 = vrot.slane %v1698, 1
        %v1701 = vor.u32 %v1696, %v1700
        %v1703 = vshll.u32 %v1536, 16
        %v1705 = vrot.slane %v1703, 1
        %v1706 = vsel %vm1025, %v1701, %v1705
        %v1708 = vshrl.u32 %v1457, 16
        %v1710 = vshll.u32 %v1457, 16
        %v1712 = vrot.slane %v1710, 1
        %v1713 = vor.u32 %v1708, %v1712
        %v1715 = vshll.u32 %v1537, 16
        %v1717 = vrot.slane %v1715, 1
        %v1718 = vsel %vm1025, %v1713, %v1717
        %v1720 = vshrl.u32 %v1458, 16
        %v1722 = vshll.u32 %v1458, 16
        %v1724 = vrot.slane %v1722, 1
        %v1725 = vor.u32 %v1720, %v1724
        %v1727 = vshll.u32 %v1538, 16
        %v1729 = vrot.slane %v1727, 1
        %v1730 = vsel %vm1025, %v1725, %v1729
        %1731 = vrot.lane.b32.xlu0 %v1550, 32
        %v1732 = vpop.permute.xlu0 %1731
        %1733 = vrot.lane.b32.xlu0 %v1562, 32
        %v1734 = vpop.permute.xlu0 %1733
        %1735 = vrot.lane.b32.xlu0 %v1574, 32
        %v1736 = vpop.permute.xlu0 %1735
        %1737 = vrot.lane.b32.xlu0 %v1586, 32
        %v1738 = vpop.permute.xlu0 %1737
        %1739 = vrot.lane.b32.xlu0 %v1598, 32
        %v1740 = vpop.permute.xlu0 %1739
        %1741 = vrot.lane.b32.xlu0 %v1610, 32
        %v1742 = vpop.permute.xlu0 %1741
        %1743 = vrot.lane.b32.xlu0 %v1622, 32
        %v1744 = vpop.permute.xlu0 %1743
        %1745 = vrot.lane.b32.xlu0 %v1634, 32
        %v1746 = vpop.permute.xlu0 %1745
        %1747 = vrot.lane.b32.xlu0 %v1646, 32
        %v1748 = vpop.permute.xlu0 %1747
        %1749 = vrot.lane.b32.xlu0 %v1658, 32
        %v1750 = vpop.permute.xlu0 %1749
        %1751 = vrot.lane.b32.xlu0 %v1670, 32
        %v1752 = vpop.permute.xlu0 %1751
        %1753 = vrot.lane.b32.xlu0 %v1682, 32
        %v1754 = vpop.permute.xlu0 %1753
        %1755 = vrot.lane.b32.xlu0 %v1694, 32
        %v1756 = vpop.permute.xlu0 %1755
        %1757 = vrot.lane.b32.xlu0 %v1706, 32
        %v1758 = vpop.permute.xlu0 %1757
        %1759 = vrot.lane.b32.xlu0 %v1718, 32
        %v1760 = vpop.permute.xlu0 %1759
        %1761 = vrot.lane.b32.xlu0 %v1730, 32
        %v1762 = vpop.permute.xlu0 %1761
        %v1779 = vunpack.c.l.b16 %v816
        %v1780 = vunpack.c.l.b16 %v817
        %v1781 = vunpack.c.l.b16 %v818
        %v1782 = vunpack.c.l.b16 %v819
        %v1783 = vunpack.c.l.b16 %v820
        %v1784 = vunpack.c.l.b16 %v821
        %v1785 = vunpack.c.l.b16 %v822
        %v1786 = vunpack.c.l.b16 %v823
        %v1787 = vunpack.c.l.b16 %v824
        %v1788 = vunpack.c.l.b16 %v825
        %v1789 = vunpack.c.l.b16 %v826
        %v1790 = vunpack.c.l.b16 %v827
        %v1791 = vunpack.c.l.b16 %v828
        %v1792 = vunpack.c.l.b16 %v829
        %v1793 = vunpack.c.l.b16 %v830
        %v1794 = vunpack.c.l.b16 %v831
        %v1795 = vpack.c.b16 %v1412, %v1779
        %v1796 = vpack.c.b16 %v1414, %v1780
        %v1797 = vpack.c.b16 %v1416, %v1781
        %v1798 = vpack.c.b16 %v1418, %v1782
        %v1799 = vpack.c.b16 %v1420, %v1783
        %v1800 = vpack.c.b16 %v1422, %v1784
        %v1801 = vpack.c.b16 %v1424, %v1785
        %v1802 = vpack.c.b16 %v1426, %v1786
        %v1803 = vpack.c.b16 %v1428, %v1787
        %v1804 = vpack.c.b16 %v1430, %v1788
        %v1805 = vpack.c.b16 %v1432, %v1789
        %v1806 = vpack.c.b16 %v1434, %v1790
        %v1807 = vpack.c.b16 %v1436, %v1791
        %v1808 = vpack.c.b16 %v1438, %v1792
        %v1809 = vpack.c.b16 %v1440, %v1793
        %v1810 = vpack.c.b16 %v1442, %v1794
        %v1811 = vrot.slane %v1795, 1
        %v1812 = vrot.slane %v1523, 1
        %v1813 = vsel %vm1298, %v1811, %v1812
        %v1814 = vrot.slane %v1796, 1
        %v1815 = vrot.slane %v1524, 1
        %v1816 = vsel %vm1298, %v1814, %v1815
        %v1817 = vrot.slane %v1797, 1
        %v1818 = vrot.slane %v1525, 1
        %v1819 = vsel %vm1298, %v1817, %v1818
        %v1820 = vrot.slane %v1798, 1
        %v1821 = vrot.slane %v1526, 1
        %v1822 = vsel %vm1298, %v1820, %v1821
        %v1823 = vrot.slane %v1799, 1
        %v1824 = vrot.slane %v1527, 1
        %v1825 = vsel %vm1298, %v1823, %v1824
        %v1826 = vrot.slane %v1800, 1
        %v1827 = vrot.slane %v1528, 1
        %v1828 = vsel %vm1298, %v1826, %v1827
        %v1829 = vrot.slane %v1801, 1
        %v1830 = vrot.slane %v1529, 1
        %v1831 = vsel %vm1298, %v1829, %v1830
        %v1832 = vrot.slane %v1802, 1
        %v1833 = vrot.slane %v1530, 1
        %v1834 = vsel %vm1298, %v1832, %v1833
        %v1835 = vrot.slane %v1803, 1
        %v1836 = vrot.slane %v1531, 1
        %v1837 = vsel %vm1298, %v1835, %v1836
        %v1838 = vrot.slane %v1804, 1
        %v1839 = vrot.slane %v1532, 1
        %v1840 = vsel %vm1298, %v1838, %v1839
        %v1841 = vrot.slane %v1805, 1
        %v1842 = vrot.slane %v1533, 1
        %v1843 = vsel %vm1298, %v1841, %v1842
        %v1844 = vrot.slane %v1806, 1
        %v1845 = vrot.slane %v1534, 1
        %v1846 = vsel %vm1298, %v1844, %v1845
        %v1847 = vrot.slane %v1807, 1
        %v1848 = vrot.slane %v1535, 1
        %v1849 = vsel %vm1298, %v1847, %v1848
        %v1850 = vrot.slane %v1808, 1
        %v1851 = vrot.slane %v1536, 1
        %v1852 = vsel %vm1298, %v1850, %v1851
        %v1853 = vrot.slane %v1809, 1
        %v1854 = vrot.slane %v1537, 1
        %v1855 = vsel %vm1298, %v1853, %v1854
        %v1856 = vrot.slane %v1810, 1
        %v1857 = vrot.slane %v1538, 1
        %v1858 = vsel %vm1298, %v1856, %v1857
        %1859 = vrot.lane.b32.xlu0 %v1813, 40
        %v1860 = vpop.permute.xlu0 %1859
        %1861 = vrot.lane.b32.xlu0 %v1816, 40
        %v1862 = vpop.permute.xlu0 %1861
        %1863 = vrot.lane.b32.xlu0 %v1819, 40
        %v1864 = vpop.permute.xlu0 %1863
        %1865 = vrot.lane.b32.xlu0 %v1822, 40
        %v1866 = vpop.permute.xlu0 %1865
        %1867 = vrot.lane.b32.xlu0 %v1825, 40
        %v1868 = vpop.permute.xlu0 %1867
        %1869 = vrot.lane.b32.xlu0 %v1828, 40
        %v1870 = vpop.permute.xlu0 %1869
        %1871 = vrot.lane.b32.xlu0 %v1831, 40
        %v1872 = vpop.permute.xlu0 %1871
        %1873 = vrot.lane.b32.xlu0 %v1834, 40
        %v1874 = vpop.permute.xlu0 %1873
        %1875 = vrot.lane.b32.xlu0 %v1837, 40
        %v1876 = vpop.permute.xlu0 %1875
        %1877 = vrot.lane.b32.xlu0 %v1840, 40
        %v1878 = vpop.permute.xlu0 %1877
        %1879 = vrot.lane.b32.xlu0 %v1843, 40
        %v1880 = vpop.permute.xlu0 %1879
        %1881 = vrot.lane.b32.xlu0 %v1846, 40
        %v1882 = vpop.permute.xlu0 %1881
        %1883 = vrot.lane.b32.xlu0 %v1849, 40
        %v1884 = vpop.permute.xlu0 %1883
        %1885 = vrot.lane.b32.xlu0 %v1852, 40
        %v1886 = vpop.permute.xlu0 %1885
        %1887 = vrot.lane.b32.xlu0 %v1855, 40
        %v1888 = vpop.permute.xlu0 %1887
        %1889 = vrot.lane.b32.xlu0 %v1858, 40
        %v1890 = vpop.permute.xlu0 %1889
        %v1923 = vunpack.c.l.b16 %v833
        %v1924 = vunpack.c.l.b16 %v834
        %v1925 = vunpack.c.l.b16 %v835
        %v1926 = vunpack.c.l.b16 %v836
        %v1927 = vunpack.c.l.b16 %v837
        %v1928 = vunpack.c.l.b16 %v838
        %v1929 = vunpack.c.l.b16 %v839
        %v1930 = vunpack.c.l.b16 %v840
        %v1931 = vunpack.c.l.b16 %v841
        %v1932 = vunpack.c.l.b16 %v842
        %v1933 = vunpack.c.l.b16 %v843
        %v1934 = vunpack.c.l.b16 %v844
        %v1935 = vunpack.c.l.b16 %v845
        %v1936 = vunpack.c.l.b16 %v846
        %v1937 = vunpack.c.l.b16 %v847
        %v1938 = vunpack.c.l.b16 %v848
        %v1939 = vunpack.c.l.b16 %v849
        %v1940 = vunpack.c.l.b16 %v850
        %v1941 = vunpack.c.l.b16 %v851
        %v1942 = vunpack.c.l.b16 %v852
        %v1943 = vunpack.c.l.b16 %v853
        %v1944 = vunpack.c.l.b16 %v854
        %v1945 = vunpack.c.l.b16 %v855
        %v1946 = vunpack.c.l.b16 %v856
        %v1947 = vunpack.c.l.b16 %v857
        %v1948 = vunpack.c.l.b16 %v858
        %v1949 = vunpack.c.l.b16 %v859
        %v1950 = vunpack.c.l.b16 %v860
        %v1951 = vunpack.c.l.b16 %v861
        %v1952 = vunpack.c.l.b16 %v862
        %v1953 = vunpack.c.l.b16 %v863
        %v1954 = vunpack.c.l.b16 %v864
        %v1955 = vpack.c.b16 %v1924, %v1923
        %v1956 = vpack.c.b16 %v1926, %v1925
        %v1957 = vpack.c.b16 %v1928, %v1927
        %v1958 = vpack.c.b16 %v1930, %v1929
        %v1959 = vpack.c.b16 %v1932, %v1931
        %v1960 = vpack.c.b16 %v1934, %v1933
        %v1961 = vpack.c.b16 %v1936, %v1935
        %v1962 = vpack.c.b16 %v1938, %v1937
        %v1963 = vpack.c.b16 %v1940, %v1939
        %v1964 = vpack.c.b16 %v1942, %v1941
        %v1965 = vpack.c.b16 %v1944, %v1943
        %v1966 = vpack.c.b16 %v1946, %v1945
        %v1967 = vpack.c.b16 %v1948, %v1947
        %v1968 = vpack.c.b16 %v1950, %v1949
        %v1969 = vpack.c.b16 %v1952, %v1951
        %v1970 = vpack.c.b16 %v1954, %v1953
        %1971 = vrot.lane.b32.xlu0 %v1955, 48
        %v1972 = vpop.permute.xlu0 %1971
        %1973 = vrot.lane.b32.xlu0 %v1956, 48
        %v1974 = vpop.permute.xlu0 %1973
        %1975 = vrot.lane.b32.xlu0 %v1957, 48
        %v1976 = vpop.permute.xlu0 %1975
        %1977 = vrot.lane.b32.xlu0 %v1958, 48
        %v1978 = vpop.permute.xlu0 %1977
        %1979 = vrot.lane.b32.xlu0 %v1959, 48
        %v1980 = vpop.permute.xlu0 %1979
        %1981 = vrot.lane.b32.xlu0 %v1960, 48
        %v1982 = vpop.permute.xlu0 %1981
        %1983 = vrot.lane.b32.xlu0 %v1961, 48
        %v1984 = vpop.permute.xlu0 %1983
        %1985 = vrot.lane.b32.xlu0 %v1962, 48
        %v1986 = vpop.permute.xlu0 %1985
        %1987 = vrot.lane.b32.xlu0 %v1963, 48
        %v1988 = vpop.permute.xlu0 %1987
        %1989 = vrot.lane.b32.xlu0 %v1964, 48
        %v1990 = vpop.permute.xlu0 %1989
        %1991 = vrot.lane.b32.xlu0 %v1965, 48
        %v1992 = vpop.permute.xlu0 %1991
        %1993 = vrot.lane.b32.xlu0 %v1966, 48
        %v1994 = vpop.permute.xlu0 %1993
        %1995 = vrot.lane.b32.xlu0 %v1967, 48
        %v1996 = vpop.permute.xlu0 %1995
        %1997 = vrot.lane.b32.xlu0 %v1968, 48
        %v1998 = vpop.permute.xlu0 %1997
        %1999 = vrot.lane.b32.xlu0 %v1969, 48
        %v2000 = vpop.permute.xlu0 %1999
        %2001 = vrot.lane.b32.xlu0 %v1970, 48
        %v2002 = vpop.permute.xlu0 %2001
        %v2019 = vunpack.c.l.b16 %v865
        %v2020 = vunpack.c.l.b16 %v866
        %v2021 = vunpack.c.l.b16 %v867
        %v2022 = vunpack.c.l.b16 %v868
        %v2023 = vunpack.c.l.b16 %v869
        %v2024 = vunpack.c.l.b16 %v870
        %v2025 = vunpack.c.l.b16 %v871
        %v2026 = vunpack.c.l.b16 %v872
        %v2027 = vunpack.c.l.b16 %v873
        %v2028 = vunpack.c.l.b16 %v874
        %v2029 = vunpack.c.l.b16 %v875
        %v2030 = vunpack.c.l.b16 %v876
        %v2031 = vunpack.c.l.b16 %v877
        %v2032 = vunpack.c.l.b16 %v878
        %v2033 = vunpack.c.l.b16 %v879
        %v2034 = vunpack.c.l.b16 %v880
        %v2035 = vpack.c.b16 %v2019, %v2019
        %v2036 = vpack.c.b16 %v2020, %v2020
        %v2037 = vpack.c.b16 %v2021, %v2021
        %v2038 = vpack.c.b16 %v2022, %v2022
        %v2039 = vpack.c.b16 %v2023, %v2023
        %v2040 = vpack.c.b16 %v2024, %v2024
        %v2041 = vpack.c.b16 %v2025, %v2025
        %v2042 = vpack.c.b16 %v2026, %v2026
        %v2043 = vpack.c.b16 %v2027, %v2027
        %v2044 = vpack.c.b16 %v2028, %v2028
        %v2045 = vpack.c.b16 %v2029, %v2029
        %v2046 = vpack.c.b16 %v2030, %v2030
        %v2047 = vpack.c.b16 %v2031, %v2031
        %v2048 = vpack.c.b16 %v2032, %v2032
        %v2049 = vpack.c.b16 %v2033, %v2033
        %v2050 = vpack.c.b16 %v2034, %v2034
        %v2052 = vshrl.u32 %v1955, 16
        %v2054 = vshll.u32 %v1955, 16
        %v2056 = vrot.slane %v2054, 1
        %v2057 = vor.u32 %v2052, %v2056
        %v2059 = vshll.u32 %v2035, 16
        %v2061 = vrot.slane %v2059, 1
        %v2062 = vsel %vm1025, %v2057, %v2061
        %v2064 = vshrl.u32 %v1956, 16
        %v2066 = vshll.u32 %v1956, 16
        %v2068 = vrot.slane %v2066, 1
        %v2069 = vor.u32 %v2064, %v2068
        %v2071 = vshll.u32 %v2036, 16
        %v2073 = vrot.slane %v2071, 1
        %v2074 = vsel %vm1025, %v2069, %v2073
        %v2076 = vshrl.u32 %v1957, 16
        %v2078 = vshll.u32 %v1957, 16
        %v2080 = vrot.slane %v2078, 1
        %v2081 = vor.u32 %v2076, %v2080
        %v2083 = vshll.u32 %v2037, 16
        %v2085 = vrot.slane %v2083, 1
        %v2086 = vsel %vm1025, %v2081, %v2085
        %v2088 = vshrl.u32 %v1958, 16
        %v2090 = vshll.u32 %v1958, 16
        %v2092 = vrot.slane %v2090, 1
        %v2093 = vor.u32 %v2088, %v2092
        %v2095 = vshll.u32 %v2038, 16
        %v2097 = vrot.slane %v2095, 1
        %v2098 = vsel %vm1025, %v2093, %v2097
        %v2100 = vshrl.u32 %v1959, 16
        %v2102 = vshll.u32 %v1959, 16
        %v2104 = vrot.slane %v2102, 1
        %v2105 = vor.u32 %v2100, %v2104
        %v2107 = vshll.u32 %v2039, 16
        %v2109 = vrot.slane %v2107, 1
        %v2110 = vsel %vm1025, %v2105, %v2109
        %v2112 = vshrl.u32 %v1960, 16
        %v2114 = vshll.u32 %v1960, 16
        %v2116 = vrot.slane %v2114, 1
        %v2117 = vor.u32 %v2112, %v2116
        %v2119 = vshll.u32 %v2040, 16
        %v2121 = vrot.slane %v2119, 1
        %v2122 = vsel %vm1025, %v2117, %v2121
        %v2124 = vshrl.u32 %v1961, 16
        %v2126 = vshll.u32 %v1961, 16
        %v2128 = vrot.slane %v2126, 1
        %v2129 = vor.u32 %v2124, %v2128
        %v2131 = vshll.u32 %v2041, 16
        %v2133 = vrot.slane %v2131, 1
        %v2134 = vsel %vm1025, %v2129, %v2133
        %v2136 = vshrl.u32 %v1962, 16
        %v2138 = vshll.u32 %v1962, 16
        %v2140 = vrot.slane %v2138, 1
        %v2141 = vor.u32 %v2136, %v2140
        %v2143 = vshll.u32 %v2042, 16
        %v2145 = vrot.slane %v2143, 1
        %v2146 = vsel %vm1025, %v2141, %v2145
        %v2148 = vshrl.u32 %v1963, 16
        %v2150 = vshll.u32 %v1963, 16
        %v2152 = vrot.slane %v2150, 1
        %v2153 = vor.u32 %v2148, %v2152
        %v2155 = vshll.u32 %v2043, 16
        %v2157 = vrot.slane %v2155, 1
        %v2158 = vsel %vm1025, %v2153, %v2157
        %v2160 = vshrl.u32 %v1964, 16
        %v2162 = vshll.u32 %v1964, 16
        %v2164 = vrot.slane %v2162, 1
        %v2165 = vor.u32 %v2160, %v2164
        %v2167 = vshll.u32 %v2044, 16
        %v2169 = vrot.slane %v2167, 1
        %v2170 = vsel %vm1025, %v2165, %v2169
        %v2172 = vshrl.u32 %v1965, 16
        %v2174 = vshll.u32 %v1965, 16
        %v2176 = vrot.slane %v2174, 1
        %v2177 = vor.u32 %v2172, %v2176
        %v2179 = vshll.u32 %v2045, 16
        %v2181 = vrot.slane %v2179, 1
        %v2182 = vsel %vm1025, %v2177, %v2181
        %v2184 = vshrl.u32 %v1966, 16
        %v2186 = vshll.u32 %v1966, 16
        %v2188 = vrot.slane %v2186, 1
        %v2189 = vor.u32 %v2184, %v2188
        %v2191 = vshll.u32 %v2046, 16
        %v2193 = vrot.slane %v2191, 1
        %v2194 = vsel %vm1025, %v2189, %v2193
        %v2196 = vshrl.u32 %v1967, 16
        %v2198 = vshll.u32 %v1967, 16
        %v2200 = vrot.slane %v2198, 1
        %v2201 = vor.u32 %v2196, %v2200
        %v2203 = vshll.u32 %v2047, 16
        %v2205 = vrot.slane %v2203, 1
        %v2206 = vsel %vm1025, %v2201, %v2205
        %v2208 = vshrl.u32 %v1968, 16
        %v2210 = vshll.u32 %v1968, 16
        %v2212 = vrot.slane %v2210, 1
        %v2213 = vor.u32 %v2208, %v2212
        %v2215 = vshll.u32 %v2048, 16
        %v2217 = vrot.slane %v2215, 1
        %v2218 = vsel %vm1025, %v2213, %v2217
        %v2220 = vshrl.u32 %v1969, 16
        %v2222 = vshll.u32 %v1969, 16
        %v2224 = vrot.slane %v2222, 1
        %v2225 = vor.u32 %v2220, %v2224
        %v2227 = vshll.u32 %v2049, 16
        %v2229 = vrot.slane %v2227, 1
        %v2230 = vsel %vm1025, %v2225, %v2229
        %v2232 = vshrl.u32 %v1970, 16
        %v2234 = vshll.u32 %v1970, 16
        %v2236 = vrot.slane %v2234, 1
        %v2237 = vor.u32 %v2232, %v2236
        %v2239 = vshll.u32 %v2050, 16
        %v2241 = vrot.slane %v2239, 1
        %v2242 = vsel %vm1025, %v2237, %v2241
        %2243 = vrot.lane.b32.xlu0 %v2062, 56
        %v2244 = vpop.permute.xlu0 %2243
        %2245 = vrot.lane.b32.xlu0 %v2074, 56
        %v2246 = vpop.permute.xlu0 %2245
        %2247 = vrot.lane.b32.xlu0 %v2086, 56
        %v2248 = vpop.permute.xlu0 %2247
        %2249 = vrot.lane.b32.xlu0 %v2098, 56
        %v2250 = vpop.permute.xlu0 %2249
        %2251 = vrot.lane.b32.xlu0 %v2110, 56
        %v2252 = vpop.permute.xlu0 %2251
        %2253 = vrot.lane.b32.xlu0 %v2122, 56
        %v2254 = vpop.permute.xlu0 %2253
        %2255 = vrot.lane.b32.xlu0 %v2134, 56
        %v2256 = vpop.permute.xlu0 %2255
        %2257 = vrot.lane.b32.xlu0 %v2146, 56
        %v2258 = vpop.permute.xlu0 %2257
        %2259 = vrot.lane.b32.xlu0 %v2158, 56
        %v2260 = vpop.permute.xlu0 %2259
        %2261 = vrot.lane.b32.xlu0 %v2170, 56
        %v2262 = vpop.permute.xlu0 %2261
        %2263 = vrot.lane.b32.xlu0 %v2182, 56
        %v2264 = vpop.permute.xlu0 %2263
        %2265 = vrot.lane.b32.xlu0 %v2194, 56
        %v2266 = vpop.permute.xlu0 %2265
        %2267 = vrot.lane.b32.xlu0 %v2206, 56
        %v2268 = vpop.permute.xlu0 %2267
        %2269 = vrot.lane.b32.xlu0 %v2218, 56
        %v2270 = vpop.permute.xlu0 %2269
        %2271 = vrot.lane.b32.xlu0 %v2230, 56
        %v2272 = vpop.permute.xlu0 %2271
        %2273 = vrot.lane.b32.xlu0 %v2242, 56
        %v2274 = vpop.permute.xlu0 %2273
        %v2291 = vunpack.c.l.b16 %v881
        %v2292 = vunpack.c.l.b16 %v882
        %v2293 = vunpack.c.l.b16 %v883
        %v2294 = vunpack.c.l.b16 %v884
        %v2295 = vunpack.c.l.b16 %v885
        %v2296 = vunpack.c.l.b16 %v886
        %v2297 = vunpack.c.l.b16 %v887
        %v2298 = vunpack.c.l.b16 %v888
        %v2299 = vunpack.c.l.b16 %v889
        %v2300 = vunpack.c.l.b16 %v890
        %v2301 = vunpack.c.l.b16 %v891
        %v2302 = vunpack.c.l.b16 %v892
        %v2303 = vunpack.c.l.b16 %v893
        %v2304 = vunpack.c.l.b16 %v894
        %v2305 = vunpack.c.l.b16 %v895
        %v2306 = vunpack.c.l.b16 %v896
        %v2307 = vpack.c.b16 %v1924, %v2291
        %v2308 = vpack.c.b16 %v1926, %v2292
        %v2309 = vpack.c.b16 %v1928, %v2293
        %v2310 = vpack.c.b16 %v1930, %v2294
        %v2311 = vpack.c.b16 %v1932, %v2295
        %v2312 = vpack.c.b16 %v1934, %v2296
        %v2313 = vpack.c.b16 %v1936, %v2297
        %v2314 = vpack.c.b16 %v1938, %v2298
        %v2315 = vpack.c.b16 %v1940, %v2299
        %v2316 = vpack.c.b16 %v1942, %v2300
        %v2317 = vpack.c.b16 %v1944, %v2301
        %v2318 = vpack.c.b16 %v1946, %v2302
        %v2319 = vpack.c.b16 %v1948, %v2303
        %v2320 = vpack.c.b16 %v1950, %v2304
        %v2321 = vpack.c.b16 %v1952, %v2305
        %v2322 = vpack.c.b16 %v1954, %v2306
        %v2323 = vrot.slane %v2307, 1
        %v2324 = vrot.slane %v2035, 1
        %v2325 = vsel %vm1298, %v2323, %v2324
        %v2326 = vrot.slane %v2308, 1
        %v2327 = vrot.slane %v2036, 1
        %v2328 = vsel %vm1298, %v2326, %v2327
        %v2329 = vrot.slane %v2309, 1
        %v2330 = vrot.slane %v2037, 1
        %v2331 = vsel %vm1298, %v2329, %v2330
        %v2332 = vrot.slane %v2310, 1
        %v2333 = vrot.slane %v2038, 1
        %v2334 = vsel %vm1298, %v2332, %v2333
        %v2335 = vrot.slane %v2311, 1
        %v2336 = vrot.slane %v2039, 1
        %v2337 = vsel %vm1298, %v2335, %v2336
        %v2338 = vrot.slane %v2312, 1
        %v2339 = vrot.slane %v2040, 1
        %v2340 = vsel %vm1298, %v2338, %v2339
        %v2341 = vrot.slane %v2313, 1
        %v2342 = vrot.slane %v2041, 1
        %v2343 = vsel %vm1298, %v2341, %v2342
        %v2344 = vrot.slane %v2314, 1
        %v2345 = vrot.slane %v2042, 1
        %v2346 = vsel %vm1298, %v2344, %v2345
        %v2347 = vrot.slane %v2315, 1
        %v2348 = vrot.slane %v2043, 1
        %v2349 = vsel %vm1298, %v2347, %v2348
        %v2350 = vrot.slane %v2316, 1
        %v2351 = vrot.slane %v2044, 1
        %v2352 = vsel %vm1298, %v2350, %v2351
        %v2353 = vrot.slane %v2317, 1
        %v2354 = vrot.slane %v2045, 1
        %v2355 = vsel %vm1298, %v2353, %v2354
        %v2356 = vrot.slane %v2318, 1
        %v2357 = vrot.slane %v2046, 1
        %v2358 = vsel %vm1298, %v2356, %v2357
        %v2359 = vrot.slane %v2319, 1
        %v2360 = vrot.slane %v2047, 1
        %v2361 = vsel %vm1298, %v2359, %v2360
        %v2362 = vrot.slane %v2320, 1
        %v2363 = vrot.slane %v2048, 1
        %v2364 = vsel %vm1298, %v2362, %v2363
        %v2365 = vrot.slane %v2321, 1
        %v2366 = vrot.slane %v2049, 1
        %v2367 = vsel %vm1298, %v2365, %v2366
        %v2368 = vrot.slane %v2322, 1
        %v2369 = vrot.slane %v2050, 1
        %v2370 = vsel %vm1298, %v2368, %v2369
        %2371 = vrot.lane.b32.xlu0 %v2325, 64
        %v2372 = vpop.permute.xlu0 %2371
        %2373 = vrot.lane.b32.xlu0 %v2328, 64
        %v2374 = vpop.permute.xlu0 %2373
        %2375 = vrot.lane.b32.xlu0 %v2331, 64
        %v2376 = vpop.permute.xlu0 %2375
        %2377 = vrot.lane.b32.xlu0 %v2334, 64
        %v2378 = vpop.permute.xlu0 %2377
        %2379 = vrot.lane.b32.xlu0 %v2337, 64
        %v2380 = vpop.permute.xlu0 %2379
        %2381 = vrot.lane.b32.xlu0 %v2340, 64
        %v2382 = vpop.permute.xlu0 %2381
        %2383 = vrot.lane.b32.xlu0 %v2343, 64
        %v2384 = vpop.permute.xlu0 %2383
        %2385 = vrot.lane.b32.xlu0 %v2346, 64
        %v2386 = vpop.permute.xlu0 %2385
        %2387 = vrot.lane.b32.xlu0 %v2349, 64
        %v2388 = vpop.permute.xlu0 %2387
        %2389 = vrot.lane.b32.xlu0 %v2352, 64
        %v2390 = vpop.permute.xlu0 %2389
        %2391 = vrot.lane.b32.xlu0 %v2355, 64
        %v2392 = vpop.permute.xlu0 %2391
        %2393 = vrot.lane.b32.xlu0 %v2358, 64
        %v2394 = vpop.permute.xlu0 %2393
        %2395 = vrot.lane.b32.xlu0 %v2361, 64
        %v2396 = vpop.permute.xlu0 %2395
        %2397 = vrot.lane.b32.xlu0 %v2364, 64
        %v2398 = vpop.permute.xlu0 %2397
        %2399 = vrot.lane.b32.xlu0 %v2367, 64
        %v2400 = vpop.permute.xlu0 %2399
        %2401 = vrot.lane.b32.xlu0 %v2370, 64
        %v2402 = vpop.permute.xlu0 %2401
        %vm2403 = vcmask 64512
        %v2405 = vsel %vm2403, %v961, %v1219
        %v2407 = vsel %vm2403, %v962, %v1221
        %v2409 = vsel %vm2403, %v963, %v1223
        %v2411 = vsel %vm2403, %v964, %v1225
        %v2413 = vsel %vm2403, %v965, %v1227
        %v2415 = vsel %vm2403, %v966, %v1229
        %v2417 = vsel %vm2403, %v967, %v1231
        %v2419 = vsel %vm2403, %v968, %v1233
        %v2421 = vsel %vm2403, %v969, %v1235
        %v2423 = vsel %vm2403, %v970, %v1237
        %v2425 = vsel %vm2403, %v971, %v1239
        %v2427 = vsel %vm2403, %v972, %v1241
        %v2429 = vsel %vm2403, %v973, %v1243
        %v2431 = vsel %vm2403, %v974, %v1245
        %v2433 = vsel %vm2403, %v975, %v1247
        %v2435 = vsel %vm2403, %v976, %v1249
        %vm2436 = vcmask 130048
        %v2438 = vsel %vm2436, %v2405, %v1348
        %v2440 = vsel %vm2436, %v2407, %v1350
        %v2442 = vsel %vm2436, %v2409, %v1352
        %v2444 = vsel %vm2436, %v2411, %v1354
        %v2446 = vsel %vm2436, %v2413, %v1356
        %v2448 = vsel %vm2436, %v2415, %v1358
        %v2450 = vsel %vm2436, %v2417, %v1360
        %v2452 = vsel %vm2436, %v2419, %v1362
        %v2454 = vsel %vm2436, %v2421, %v1364
        %v2456 = vsel %vm2436, %v2423, %v1366
        %v2458 = vsel %vm2436, %v2425, %v1368
        %v2460 = vsel %vm2436, %v2427, %v1370
        %v2462 = vsel %vm2436, %v2429, %v1372
        %v2464 = vsel %vm2436, %v2431, %v1374
        %v2466 = vsel %vm2436, %v2433, %v1376
        %v2468 = vsel %vm2436, %v2435, %v1378
        %vm2469 = vcmask 195584
        %v2471 = vsel %vm2469, %v2438, %v1460
        %v2473 = vsel %vm2469, %v2440, %v1462
        %v2475 = vsel %vm2469, %v2442, %v1464
        %v2477 = vsel %vm2469, %v2444, %v1466
        %v2479 = vsel %vm2469, %v2446, %v1468
        %v2481 = vsel %vm2469, %v2448, %v1470
        %v2483 = vsel %vm2469, %v2450, %v1472
        %v2485 = vsel %vm2469, %v2452, %v1474
        %v2487 = vsel %vm2469, %v2454, %v1476
        %v2489 = vsel %vm2469, %v2456, %v1478
        %v2491 = vsel %vm2469, %v2458, %v1480
        %v2493 = vsel %vm2469, %v2460, %v1482
        %v2495 = vsel %vm2469, %v2462, %v1484
        %v2497 = vsel %vm2469, %v2464, %v1486
        %v2499 = vsel %vm2469, %v2466, %v1488
        %v2501 = vsel %vm2469, %v2468, %v1490
        %vm2502 = vcmask 261120
        %v2504 = vsel %vm2502, %v2471, %v1732
        %v2506 = vsel %vm2502, %v2473, %v1734
        %v2508 = vsel %vm2502, %v2475, %v1736
        %v2510 = vsel %vm2502, %v2477, %v1738
        %v2512 = vsel %vm2502, %v2479, %v1740
        %v2514 = vsel %vm2502, %v2481, %v1742
        %v2516 = vsel %vm2502, %v2483, %v1744
        %v2518 = vsel %vm2502, %v2485, %v1746
        %v2520 = vsel %vm2502, %v2487, %v1748
        %v2522 = vsel %vm2502, %v2489, %v1750
        %v2524 = vsel %vm2502, %v2491, %v1752
        %v2526 = vsel %vm2502, %v2493, %v1754
        %v2528 = vsel %vm2502, %v2495, %v1756
        %v2530 = vsel %vm2502, %v2497, %v1758
        %v2532 = vsel %vm2502, %v2499, %v1760
        %v2534 = vsel %vm2502, %v2501, %v1762
        %vm2535 = vcmask 326656
        %v2537 = vsel %vm2535, %v2504, %v1860
        %v2539 = vsel %vm2535, %v2506, %v1862
        %v2541 = vsel %vm2535, %v2508, %v1864
        %v2543 = vsel %vm2535, %v2510, %v1866
        %v2545 = vsel %vm2535, %v2512, %v1868
        %v2547 = vsel %vm2535, %v2514, %v1870
        %v2549 = vsel %vm2535, %v2516, %v1872
        %v2551 = vsel %vm2535, %v2518, %v1874
        %v2553 = vsel %vm2535, %v2520, %v1876
        %v2555 = vsel %vm2535, %v2522, %v1878
        %v2557 = vsel %vm2535, %v2524, %v1880
        %v2559 = vsel %vm2535, %v2526, %v1882
        %v2561 = vsel %vm2535, %v2528, %v1884
        %v2563 = vsel %vm2535, %v2530, %v1886
        %v2565 = vsel %vm2535, %v2532, %v1888
        %v2567 = vsel %vm2535, %v2534, %v1890
        %vm2568 = vcmask 392192
        %v2570 = vsel %vm2568, %v2537, %v1972
        %v2572 = vsel %vm2568, %v2539, %v1974
        %v2574 = vsel %vm2568, %v2541, %v1976
        %v2576 = vsel %vm2568, %v2543, %v1978
        %v2578 = vsel %vm2568, %v2545, %v1980
        %v2580 = vsel %vm2568, %v2547, %v1982
        %v2582 = vsel %vm2568, %v2549, %v1984
        %v2584 = vsel %vm2568, %v2551, %v1986
        %v2586 = vsel %vm2568, %v2553, %v1988
        %v2588 = vsel %vm2568, %v2555, %v1990
        %v2590 = vsel %vm2568, %v2557, %v1992
        %v2592 = vsel %vm2568, %v2559, %v1994
        %v2594 = vsel %vm2568, %v2561, %v1996
        %v2596 = vsel %vm2568, %v2563, %v1998
        %v2598 = vsel %vm2568, %v2565, %v2000
        %v2600 = vsel %vm2568, %v2567, %v2002
        %vm2601 = vcmask 457728
        %v2603 = vsel %vm2601, %v2570, %v2244
        %v2605 = vsel %vm2601, %v2572, %v2246
        %v2607 = vsel %vm2601, %v2574, %v2248
        %v2609 = vsel %vm2601, %v2576, %v2250
        %v2611 = vsel %vm2601, %v2578, %v2252
        %v2613 = vsel %vm2601, %v2580, %v2254
        %v2615 = vsel %vm2601, %v2582, %v2256
        %v2617 = vsel %vm2601, %v2584, %v2258
        %v2619 = vsel %vm2601, %v2586, %v2260
        %v2621 = vsel %vm2601, %v2588, %v2262
        %v2623 = vsel %vm2601, %v2590, %v2264
        %v2625 = vsel %vm2601, %v2592, %v2266
        %v2627 = vsel %vm2601, %v2594, %v2268
        %v2629 = vsel %vm2601, %v2596, %v2270
        %v2631 = vsel %vm2601, %v2598, %v2272
        %v2633 = vsel %vm2601, %v2600, %v2274
        %vm2634 = vcmask 523264
        %v2636 = vsel %vm2634, %v2603, %v2372
        %v2638 = vsel %vm2634, %v2605, %v2374
        %v2640 = vsel %vm2634, %v2607, %v2376
        %v2642 = vsel %vm2634, %v2609, %v2378
        %v2644 = vsel %vm2634, %v2611, %v2380
        %v2646 = vsel %vm2634, %v2613, %v2382
        %v2648 = vsel %vm2634, %v2615, %v2384
        %v2650 = vsel %vm2634, %v2617, %v2386
        %v2652 = vsel %vm2634, %v2619, %v2388
        %v2654 = vsel %vm2634, %v2621, %v2390
        %v2656 = vsel %vm2634, %v2623, %v2392
        %v2658 = vsel %vm2634, %v2625, %v2394
        %v2660 = vsel %vm2634, %v2627, %v2396
        %v2662 = vsel %vm2634, %v2629, %v2398
        %v2664 = vsel %vm2634, %v2631, %v2400
        %v2666 = vsel %vm2634, %v2633, %v2402
        %v2667 = vld [vmem:[%s1] sm:$0xf]
        %v2668 = vld [vmem:[%s1 + $0x4] sm:$0xf]
        %v2669 = vld [vmem:[%s1 + $0x8] sm:$0xf]
        %v2670 = vld [vmem:[%s1 + $0xc] sm:$0xf]
        %v2671 = vld [vmem:[%s1 + $0x10] sm:$0xf]
        %v2672 = vld [vmem:[%s1 + $0x14] sm:$0xf]
        %v2673 = vld [vmem:[%s1 + $0x18] sm:$0xf]
        %v2674 = vld [vmem:[%s1 + $0x1c] sm:$0xf]
        %v2675 = vld [vmem:[%s1 + $0x20] sm:$0xf]
        %v2676 = vld [vmem:[%s2] sm:$0x1]
        %v2678 = vlaneseq
        %v2679 = vshrl.u32 %v2678, 7
        %v2680 = vsub.s32 0, %v2679
        %v2681 = vrot.slane %v2676, %v2680
        %v2692 = vunpack.c.l.b16 %v2667
        %v2693 = vunpack.c.l.b16 %v2668
        %v2694 = vunpack.c.l.b16 %v2669
        %v2695 = vunpack.c.l.b16 %v2670
        %v2696 = vunpack.c.l.b16 %v2671
        %v2697 = vunpack.c.l.b16 %v2672
        %v2698 = vunpack.c.l.b16 %v2673
        %v2699 = vunpack.c.l.b16 %v2674
        %v2700 = vunpack.c.l.b16 %v2675
        %v2701 = vpack.c.b16 %v2693, %v2692
        %v2702 = vpack.c.b16 %v2695, %v2694
        %v2703 = vpack.c.b16 %v2697, %v2696
        %v2704 = vpack.c.b16 %v2699, %v2698
        %v2705 = vpack.c.b16 %v2700, %v2700
        %vm2710 = vcmask 588800
        %v2711 = vsel %vm2710, %v2636, 0
        %v2713 = vsel %vm2710, %v2638, 0
        %v2715 = vsel %vm2710, %v2640, 0
        %v2717 = vsel %vm2710, %v2642, 0
        %v2719 = vsel %vm2710, %v2644, 0
        %v2721 = vsel %vm2710, %v2646, 0
        %v2723 = vsel %vm2710, %v2648, 0
        %v2725 = vsel %vm2710, %v2650, 0
        %v2727 = vsel %vm2710, %v2652, 0
        %v2729 = vsel %vm2710, %v2654, 0
        %v2731 = vsel %vm2710, %v2656, 0
        %v2733 = vsel %vm2710, %v2658, 0
        %v2735 = vsel %vm2710, %v2660, 0
        %v2737 = vsel %vm2710, %v2662, 0
        %v2739 = vsel %vm2710, %v2664, 0
        %v2741 = vsel %vm2710, %v2666, 0
        %vm2743 = vcmask 1043456
        %v2745 = vsel %vm2743, %v2705, 0
        %2747 = vmatprep.subr.bf16.mxu0 0
        %2748 = vmatpush1.bf16.msra.mxu0 0
        %2749 = vmatprep.subr.bf16.mxu0 0
        %2750 = vmatpush1.bf16.msra.mxu0 0
        %2751 = vmatprep.subr.bf16.mxu0 0
        %2752 = vmatpush1.bf16.msra.mxu0 0
        %2753 = vmatprep.subr.bf16.mxu0 0
        %2754 = vmatpush1.bf16.msra.mxu0 %v2745
        %2755 = vmatprep.subr.bf16.mxu0 0
        %2756 = vmatpush1.bf16.msra.mxu0 %v2704
        %2757 = vmatprep.subr.bf16.mxu0 0
        %2758 = vmatpush1.bf16.msra.mxu0 %v2703
        %2759 = vmatprep.subr.bf16.mxu0 0
        %2760 = vmatpush1.bf16.msra.mxu0 %v2702
        %2761 = vmatprep.subr.bf16.mxu0 0
        %2762 = vmatpush1.bf16.msra.mxu0 %v2701
        %2763 = vmatprep.subr.bf16.mxu0 0
        %2764 = vmatpush2.bf16.msra.mxu0 0
        %2765 = vmatprep.subr.bf16.mxu0 0
        %2766 = vmatpush2.bf16.msra.mxu0 0
        %2767 = vmatprep.subr.bf16.mxu0 0
        %2768 = vmatpush2.bf16.msra.mxu0 0
        %2769 = vmatprep.subr.bf16.mxu0 0
        %2770 = vmatpush2.bf16.msra.mxu0 0
        %2771 = vmatprep.subr.bf16.mxu0 0
        %2772 = vmatpush2.bf16.msra.mxu0 0
        %2773 = vmatprep.subr.bf16.mxu0 0
        %2774 = vmatpush2.bf16.msra.mxu0 0
        %2775 = vmatprep.subr.bf16.mxu0 0
        %2776 = vmatpush2.bf16.msra.mxu0 0
        %2777 = vmatprep.subr.bf16.mxu0 0
        %2778 = vmatpush2.bf16.msra.mxu0 0
        %2779 = vmatprep.mubr.bf16.mxu0 0
        %2780 = vmatmul.mubr.bf16.gmra.mxu0 %v2711
        %v2781 = vpop.f32.mrf.mxu0
        %v2782 = vadd.f32 %v2681, %v2781
        %v2783 = vpop.f32.mrf.mxu0
        %v2784 = vpop.f32.mrf.mxu0
        %v2785 = vadd.f32 %v2681, %v2784
        %v2786 = vpop.f32.mrf.mxu0
        %2787 = vmatprep.mubr.bf16.mxu0 0
        %2788 = vmatmul.mubr.bf16.gmra.mxu0 %v2713
        %v2789 = vpop.f32.mrf.mxu0
        %v2790 = vadd.f32 %v2681, %v2789
        %v2791 = vpop.f32.mrf.mxu0
        %v2792 = vpop.f32.mrf.mxu0
        %v2793 = vadd.f32 %v2681, %v2792
        %v2794 = vpop.f32.mrf.mxu0
        %2795 = vmatprep.mubr.bf16.mxu0 0
        %2796 = vmatmul.mubr.bf16.gmra.mxu0 %v2715
        %v2797 = vpop.f32.mrf.mxu0
        %v2798 = vadd.f32 %v2681, %v2797
        %v2799 = vpop.f32.mrf.mxu0
        %v2800 = vpop.f32.mrf.mxu0
        %v2801 = vadd.f32 %v2681, %v2800
        %v2802 = vpop.f32.mrf.mxu0
        %2803 = vmatprep.mubr.bf16.mxu0 0
        %2804 = vmatmul.mubr.bf16.gmra.mxu0 %v2717
        %v2805 = vpop.f32.mrf.mxu0
        %v2806 = vadd.f32 %v2681, %v2805
        %v2807 = vpop.f32.mrf.mxu0
        %v2808 = vpop.f32.mrf.mxu0
        %v2809 = vadd.f32 %v2681, %v2808
        %v2810 = vpop.f32.mrf.mxu0
        %2811 = vmatprep.mubr.bf16.mxu0 0
        %2812 = vmatmul.mubr.bf16.gmra.mxu0 %v2719
        %v2813 = vpop.f32.mrf.mxu0
        %v2814 = vadd.f32 %v2681, %v2813
        %v2815 = vpop.f32.mrf.mxu0
        %v2816 = vpop.f32.mrf.mxu0
        %v2817 = vadd.f32 %v2681, %v2816
        %v2818 = vpop.f32.mrf.mxu0
        %2819 = vmatprep.mubr.bf16.mxu0 0
        %2820 = vmatmul.mubr.bf16.gmra.mxu0 %v2721
        %v2821 = vpop.f32.mrf.mxu0
        %v2822 = vadd.f32 %v2681, %v2821
        %v2823 = vpop.f32.mrf.mxu0
        %v2824 = vpop.f32.mrf.mxu0
        %v2825 = vadd.f32 %v2681, %v2824
        %v2826 = vpop.f32.mrf.mxu0
        %2827 = vmatprep.mubr.bf16.mxu0 0
        %2828 = vmatmul.mubr.bf16.gmra.mxu0 %v2723
        %v2829 = vpop.f32.mrf.mxu0
        %v2830 = vadd.f32 %v2681, %v2829
        %v2831 = vpop.f32.mrf.mxu0
        %v2832 = vpop.f32.mrf.mxu0
        %v2833 = vadd.f32 %v2681, %v2832
        %v2834 = vpop.f32.mrf.mxu0
        %2835 = vmatprep.mubr.bf16.mxu0 0
        %2836 = vmatmul.mubr.bf16.gmra.mxu0 %v2725
        %v2837 = vpop.f32.mrf.mxu0
        %v2838 = vadd.f32 %v2681, %v2837
        %v2839 = vpop.f32.mrf.mxu0
        %v2840 = vpop.f32.mrf.mxu0
        %v2841 = vadd.f32 %v2681, %v2840
        %v2842 = vpop.f32.mrf.mxu0
        %2843 = vmatprep.mubr.bf16.mxu0 0
        %2844 = vmatmul.mubr.bf16.gmra.mxu0 %v2727
        %v2845 = vpop.f32.mrf.mxu0
        %v2846 = vadd.f32 %v2681, %v2845
        %v2847 = vpop.f32.mrf.mxu0
        %v2848 = vpop.f32.mrf.mxu0
        %v2849 = vadd.f32 %v2681, %v2848
        %v2850 = vpop.f32.mrf.mxu0
        %2851 = vmatprep.mubr.bf16.mxu0 0
        %2852 = vmatmul.mubr.bf16.gmra.mxu0 %v2729
        %v2853 = vpop.f32.mrf.mxu0
        %v2854 = vadd.f32 %v2681, %v2853
        %v2855 = vpop.f32.mrf.mxu0
        %v2856 = vpop.f32.mrf.mxu0
        %v2857 = vadd.f32 %v2681, %v2856
        %v2858 = vpop.f32.mrf.mxu0
        %2859 = vmatprep.mubr.bf16.mxu0 0
        %2860 = vmatmul.mubr.bf16.gmra.mxu0 %v2731
        %v2861 = vpop.f32.mrf.mxu0
        %v2862 = vadd.f32 %v2681, %v2861
        %v2863 = vpop.f32.mrf.mxu0
        %v2864 = vpop.f32.mrf.mxu0
        %v2865 = vadd.f32 %v2681, %v2864
        %v2866 = vpop.f32.mrf.mxu0
        %2867 = vmatprep.mubr.bf16.mxu0 0
        %2868 = vmatmul.mubr.bf16.gmra.mxu0 %v2733
        %v2869 = vpop.f32.mrf.mxu0
        %v2870 = vadd.f32 %v2681, %v2869
        %v2871 = vpop.f32.mrf.mxu0
        %v2872 = vpop.f32.mrf.mxu0
        %v2873 = vadd.f32 %v2681, %v2872
        %v2874 = vpop.f32.mrf.mxu0
        %2875 = vmatprep.mubr.bf16.mxu0 0
        %2876 = vmatmul.mubr.bf16.gmra.mxu0 %v2735
        %v2877 = vpop.f32.mrf.mxu0
        %v2878 = vadd.f32 %v2681, %v2877
        %v2879 = vpop.f32.mrf.mxu0
        %v2880 = vpop.f32.mrf.mxu0
        %v2881 = vadd.f32 %v2681, %v2880
        %v2882 = vpop.f32.mrf.mxu0
        %2883 = vmatprep.mubr.bf16.mxu0 0
        %2884 = vmatmul.mubr.bf16.gmra.mxu0 %v2737
        %v2885 = vpop.f32.mrf.mxu0
        %v2886 = vadd.f32 %v2681, %v2885
        %v2887 = vpop.f32.mrf.mxu0
        %v2888 = vpop.f32.mrf.mxu0
        %v2889 = vadd.f32 %v2681, %v2888
        %v2890 = vpop.f32.mrf.mxu0
        %2891 = vmatprep.mubr.bf16.mxu0 0
        %2892 = vmatmul.mubr.bf16.gmra.mxu0 %v2739
        %v2893 = vpop.f32.mrf.mxu0
        %v2894 = vadd.f32 %v2681, %v2893
        %v2895 = vpop.f32.mrf.mxu0
        %v2896 = vpop.f32.mrf.mxu0
        %v2897 = vadd.f32 %v2681, %v2896
        %v2898 = vpop.f32.mrf.mxu0
        %2899 = vmatprep.mubr.bf16.mxu0 0
        %2900 = vmatmul.mubr.bf16.gmra.mxu0 %v2741
        %v2901 = vpop.f32.mrf.mxu0
        %v2902 = vadd.f32 %v2681, %v2901
        %v2903 = vpop.f32.mrf.mxu0
        %v2904 = vpop.f32.mrf.mxu0
        %v2905 = vadd.f32 %v2681, %v2904
        %v2906 = vpop.f32.mrf.mxu0
        %2907 = vdwg.mxu0
        %v2908 = vmax.f32 %v2782, 0.0
        %v2909 = vmax.f32 %v2785, 0.0
        %v2910 = vmax.f32 %v2790, 0.0
        %v2911 = vmax.f32 %v2793, 0.0
        %v2912 = vmax.f32 %v2798, 0.0
        %v2913 = vmax.f32 %v2801, 0.0
        %v2914 = vmax.f32 %v2806, 0.0
        %v2915 = vmax.f32 %v2809, 0.0
        %v2916 = vmax.f32 %v2814, 0.0
        %v2917 = vmax.f32 %v2817, 0.0
        %v2918 = vmax.f32 %v2822, 0.0
        %v2919 = vmax.f32 %v2825, 0.0
        %v2920 = vmax.f32 %v2830, 0.0
        %v2921 = vmax.f32 %v2833, 0.0
        %v2922 = vmax.f32 %v2838, 0.0
        %v2923 = vmax.f32 %v2841, 0.0
        %v2924 = vmax.f32 %v2846, 0.0
        %v2925 = vmax.f32 %v2849, 0.0
        %v2926 = vmax.f32 %v2854, 0.0
        %v2927 = vmax.f32 %v2857, 0.0
        %v2928 = vmax.f32 %v2862, 0.0
        %v2929 = vmax.f32 %v2865, 0.0
        %v2930 = vmax.f32 %v2870, 0.0
        %v2931 = vmax.f32 %v2873, 0.0
        %v2932 = vmax.f32 %v2878, 0.0
        %v2933 = vmax.f32 %v2881, 0.0
        %v2934 = vmax.f32 %v2886, 0.0
        %v2935 = vmax.f32 %v2889, 0.0
        %v2936 = vmax.f32 %v2894, 0.0
        %v2937 = vmax.f32 %v2897, 0.0
        %v2938 = vmax.f32 %v2902, 0.0
        %v2939 = vmax.f32 %v2905, 0.0
        %v2940 = vpack.c.bf16 %v2909, %v2908
        %v2941 = vpack.c.bf16 %v2911, %v2910
        %v2942 = vpack.c.bf16 %v2913, %v2912
        %v2943 = vpack.c.bf16 %v2915, %v2914
        %v2944 = vpack.c.bf16 %v2917, %v2916
        %v2945 = vpack.c.bf16 %v2919, %v2918
        %v2946 = vpack.c.bf16 %v2921, %v2920
        %v2947 = vpack.c.bf16 %v2923, %v2922
        %v2948 = vpack.c.bf16 %v2925, %v2924
        %v2949 = vpack.c.bf16 %v2927, %v2926
        %v2950 = vpack.c.bf16 %v2929, %v2928
        %v2951 = vpack.c.bf16 %v2931, %v2930
        %v2952 = vpack.c.bf16 %v2933, %v2932
        %v2953 = vpack.c.bf16 %v2935, %v2934
        %v2954 = vpack.c.bf16 %v2937, %v2936
        %v2955 = vpack.c.bf16 %v2939, %v2938
        %v2972 = vunpack.c.l.b16 %v2940
        %v2973 = vunpack.c.h.b16 %v2940
        %v2974 = vunpack.c.l.b16 %v2941
        %v2975 = vunpack.c.h.b16 %v2941
        %v2976 = vunpack.c.l.b16 %v2942
        %v2977 = vunpack.c.h.b16 %v2942
        %v2978 = vunpack.c.l.b16 %v2943
        %v2979 = vunpack.c.h.b16 %v2943
        %v2980 = vunpack.c.l.b16 %v2944
        %v2981 = vunpack.c.h.b16 %v2944
        %v2982 = vunpack.c.l.b16 %v2945
        %v2983 = vunpack.c.h.b16 %v2945
        %v2984 = vunpack.c.l.b16 %v2946
        %v2985 = vunpack.c.h.b16 %v2946
        %v2986 = vunpack.c.l.b16 %v2947
        %v2987 = vunpack.c.h.b16 %v2947
        %v2988 = vunpack.c.l.b16 %v2948
        %v2989 = vunpack.c.h.b16 %v2948
        %v2990 = vunpack.c.l.b16 %v2949
        %v2991 = vunpack.c.h.b16 %v2949
        %v2992 = vunpack.c.l.b16 %v2950
        %v2993 = vunpack.c.h.b16 %v2950
        %v2994 = vunpack.c.l.b16 %v2951
        %v2995 = vunpack.c.h.b16 %v2951
        %v2996 = vunpack.c.l.b16 %v2952
        %v2997 = vunpack.c.h.b16 %v2952
        %v2998 = vunpack.c.l.b16 %v2953
        %v2999 = vunpack.c.h.b16 %v2953
        %v3000 = vunpack.c.l.b16 %v2954
        %v3001 = vunpack.c.h.b16 %v2954
        %v3002 = vunpack.c.l.b16 %v2955
        %v3003 = vunpack.c.h.b16 %v2955
        %v3004 = vpack.c.b16 %v2972, %v2972
        %v3005 = vpack.c.b16 %v2973, %v2973
        %v3006 = vpack.c.b16 %v2974, %v2974
        %v3007 = vpack.c.b16 %v2975, %v2975
        %v3008 = vpack.c.b16 %v2976, %v2976
        %v3009 = vpack.c.b16 %v2977, %v2977
        %v3010 = vpack.c.b16 %v2978, %v2978
        %v3011 = vpack.c.b16 %v2979, %v2979
        %v3012 = vpack.c.b16 %v2980, %v2980
        %v3013 = vpack.c.b16 %v2981, %v2981
        %v3014 = vpack.c.b16 %v2982, %v2982
        %v3015 = vpack.c.b16 %v2983, %v2983
        %v3016 = vpack.c.b16 %v2984, %v2984
        %v3017 = vpack.c.b16 %v2985, %v2985
        %v3018 = vpack.c.b16 %v2986, %v2986
        %v3019 = vpack.c.b16 %v2987, %v2987
        %v3020 = vpack.c.b16 %v2988, %v2988
        %v3021 = vpack.c.b16 %v2989, %v2989
        %v3022 = vpack.c.b16 %v2990, %v2990
        %v3023 = vpack.c.b16 %v2991, %v2991
        %v3024 = vpack.c.b16 %v2992, %v2992
        %v3025 = vpack.c.b16 %v2993, %v2993
        %v3026 = vpack.c.b16 %v2994, %v2994
        %v3027 = vpack.c.b16 %v2995, %v2995
        %v3028 = vpack.c.b16 %v2996, %v2996
        %v3029 = vpack.c.b16 %v2997, %v2997
        %v3030 = vpack.c.b16 %v2998, %v2998
        %v3031 = vpack.c.b16 %v2999, %v2999
        %v3032 = vpack.c.b16 %v3000, %v3000
        %v3033 = vpack.c.b16 %v3001, %v3001
        %v3034 = vpack.c.b16 %v3002, %v3002
        %v3035 = vpack.c.b16 %v3003, %v3003
        %vm3068 = vcmask 519168
        %3069 = vst.msk [vmem:[%s163] sm:$0xf] %vm3068, %v3004
        %3070 = vst.msk [vmem:[%s163 + $0x4] sm:$0xf] %vm3068, %v3005
        %3071 = vst.msk [vmem:[%s163 + $0x8] sm:$0xf] %vm3068, %v3006
        %3072 = vst.msk [vmem:[%s163 + $0xc] sm:$0xf] %vm3068, %v3007
        %3073 = vst.msk [vmem:[%s163 + $0x10] sm:$0xf] %vm3068, %v3008
        %3074 = vst.msk [vmem:[%s163 + $0x14] sm:$0xf] %vm3068, %v3009
        %3075 = vst.msk [vmem:[%s163 + $0x18] sm:$0xf] %vm3068, %v3010
        %3076 = vst.msk [vmem:[%s163 + $0x1c] sm:$0xf] %vm3068, %v3011
        %3077 = vst.msk [vmem:[%s163 + $0x20] sm:$0xf] %vm3068, %v3012
        %3078 = vst.msk [vmem:[%s163 + $0x24] sm:$0xf] %vm3068, %v3013
        %3079 = vst.msk [vmem:[%s163 + $0x28] sm:$0xf] %vm3068, %v3014
        %3080 = vst.msk [vmem:[%s163 + $0x2c] sm:$0xf] %vm3068, %v3015
        %3081 = vst.msk [vmem:[%s163 + $0x30] sm:$0xf] %vm3068, %v3016
        %3082 = vst.msk [vmem:[%s163 + $0x34] sm:$0xf] %vm3068, %v3017
        %3083 = vst.msk [vmem:[%s163 + $0x38] sm:$0xf] %vm3068, %v3018
        %3084 = vst.msk [vmem:[%s163 + $0x3c] sm:$0xf] %vm3068, %v3019
        %3085 = vst.msk [vmem:[%s163 + $0x40] sm:$0xf] %vm3068, %v3020
        %3086 = vst.msk [vmem:[%s163 + $0x44] sm:$0xf] %vm3068, %v3021
        %3087 = vst.msk [vmem:[%s163 + $0x48] sm:$0xf] %vm3068, %v3022
        %3088 = vst.msk [vmem:[%s163 + $0x4c] sm:$0xf] %vm3068, %v3023
        %3089 = vst.msk [vmem:[%s163 + $0x50] sm:$0xf] %vm3068, %v3024
        %3090 = vst.msk [vmem:[%s163 + $0x54] sm:$0xf] %vm3068, %v3025
        %3091 = vst.msk [vmem:[%s163 + $0x58] sm:$0xf] %vm3068, %v3026
        %3092 = vst.msk [vmem:[%s163 + $0x5c] sm:$0xf] %vm3068, %v3027
        %3093 = vst.msk [vmem:[%s163 + $0x60] sm:$0xf] %vm3068, %v3028
        %3094 = vst.msk [vmem:[%s163 + $0x64] sm:$0xf] %vm3068, %v3029
        %3095 = vst.msk [vmem:[%s163 + $0x68] sm:$0xf] %vm3068, %v3030
        %3096 = vst.msk [vmem:[%s163 + $0x6c] sm:$0xf] %vm3068, %v3031
        %3097 = vst.msk [vmem:[%s163 + $0x70] sm:$0xf] %vm3068, %v3032
        %3098 = vst.msk [vmem:[%s163 + $0x74] sm:$0xf] %vm3068, %v3033
        %3099 = vst.msk [vmem:[%s163 + $0x78] sm:$0xf] %vm3068, %v3034
        %3100 = vst.msk [vmem:[%s163 + $0x7c] sm:$0xf] %vm3068, %v3035
        %s3101 = sand.u32 %s93, 1
        %s3102 = scalar_lea.sflag [#allocation4], %s3101
        %s3103 = sand.u32 %s93, 1
        %s3104 = smul.addr %s3103, 128
        %s3105 = scalar_lea.vmem [#allocation3], %s3104
        // Predicated region
        $region37: #{tpu_custom_call.1} parent=31 // pred_check
          %p3106 = pneg %p103
        $region38: #{tpu_custom_call.1} parent=31 // pred_check_branch
          %3108 = sbr.rel (%p3106) target = $region40
        $region39: #{tpu_custom_call.1} parent=31 // pred_region
          %s3110 = ssub.s32 2048, 2048
          %3111 = vsyncadd %s3102, %s3110
          %s3112 = smul.addr %s17, 32
          %s3113 = smul.addr %s3112, 64
          %s3114 = scalar_lea.hbm %s3, %s3113
          %s3115 = sshll.u32 %s3105, 4
          %s3116 = int_to_ptr.vmem [resolvable:$true] %s3115
          %3121 = dma.vmem_to_hbm [thread:$0]  %s3116, 2048, %s3114, %s3102, 64, 64, 4
        $region40: #{tpu_custom_call.1} parent=31 // pred_fallthru
          _
      $region32: #{tpu_custom_call.1} parent=5 // pred_fallthru
        _
      %p3122 = scmp.le.s32.totalorder 2, %s12
      // Predicated region
      $region41: #{tpu_custom_call.1} parent=5 // pred_check
        %p3123 = pneg %p3122
      $region42: #{tpu_custom_call.1} parent=5 // pred_check_branch
        %3125 = sbr.rel (%p3123) target = $region44
      $region43: #{tpu_custom_call.1} parent=5 // pred_region
        %s3126 = ssub.s32 %s12, 2
        // Predicated region
        $region45: #{tpu_custom_call.1} parent=43 // pred_check
          %p3127 = pneg %p109
        $region46: #{tpu_custom_call.1} parent=43 // pred_check_branch
          %3129 = sbr.rel (%p3127) target = $region48
        $region47: #{tpu_custom_call.1} parent=43 // pred_region
          %s3130 = sand.u32 %s94, 1
          %s3131 = scalar_lea.sflag [#allocation4], %s3130
          %s3132 = sand.u32 %s94, 1
          %s3133 = smul.addr %s3132, 128
          %s3134 = scalar_lea.vmem [#allocation3], %s3133
          %3135 = dma.done %s3131, 2048
        $region48: #{tpu_custom_call.1} parent=43 // pred_fallthru
          _
      $region44: #{tpu_custom_call.1} parent=5 // pred_fallthru
        _
    $region6: #{tpu_custom_call.1} parent=1 // loop_footer
      %s16 = sadd.s32 1, %s12
    $region7: #{tpu_custom_call.1} parent=1 // loop_footer_branch
      %11 = sbr.rel target = $region3
    $region8: #{tpu_custom_call.1} parent=1 // loop_exit
      _
    %3136 = vsyncpa [#allocation4], 1
    %s3137 = scalar_lea.sflag [#allocation4], 1
    %3138 = vsyncpa %s3137, 1

</llo_original>
